<compile_context>
chip_gen: v7x
topology: tpu7x:2x2x1
jax: 0.10.0
libtpu: 0.0.40
codegen_flags: <defaults>
</compile_context>

<pallas_src>
import functools

import jax
import jax.numpy as jnp
import numpy as np
from jax import lax
from jax.experimental import pallas as pl
from jax.experimental.pallas import tpu as pltpu


_SQRT_2_OVER_PI = 0.7978845608028654


def _round_up(a, b):
    return (a + b - 1) // b * b


# ----------------------------------------------------------------------------
# Fused kernel: LayerNorm + Linear(dim->hidden) + GELU + Linear(hidden->dim)
# ----------------------------------------------------------------------------
def _ffn_kernel(x_ref, g_ref, be_ref, w1_ref, b1_ref, w2_ref, b2_ref, o_ref,
                *, eps):
    # x_ref: (TM, dim)   g_ref/be_ref: (1, dim)
    # w1_ref: (dim, hidden)  b1_ref: (1, hidden)
    # w2_ref: (hidden, dim)  b2_ref: (1, dim)
    x = x_ref[...].astype(jnp.float32)

    # LayerNorm over the last (lane) axis, f32 math.
    mean = jnp.mean(x, axis=-1, keepdims=True)
    xc = x - mean
    var = jnp.mean(xc * xc, axis=-1, keepdims=True)
    xn = xc * lax.rsqrt(var + eps)
    xn = xn * g_ref[...].astype(jnp.float32) + be_ref[...].astype(jnp.float32)

    # Linear 1 (MXU, f32 accumulation) + bias + GELU (tanh approximation).
    h = jnp.dot(xn.astype(w1_ref.dtype), w1_ref[...],
                preferred_element_type=jnp.float32)
    h = h + b1_ref[...].astype(jnp.float32)
    h = 0.5 * h * (1.0 + jnp.tanh(_SQRT_2_OVER_PI * (h + 0.044715 * h * h * h)))

    # Linear 2 (MXU, f32 accumulation) + bias.
    o = jnp.dot(h.astype(w2_ref.dtype), w2_ref[...],
                preferred_element_type=jnp.float32)
    o = o + b2_ref[...].astype(jnp.float32)

    o_ref[...] = o.astype(o_ref.dtype)


# ----------------------------------------------------------------------------
# Wrapper
# ----------------------------------------------------------------------------
def feedforward_forward(x, params, *, tile_m=256, matmul_dtype=jnp.float32,
                        eps=1e-5):
    """x: (..., dim).  params = (gamma, beta, w1, b1, w2, b2) with
    gamma/beta: (1, dim), w1: (dim, hidden), b1: (1, hidden),
    w2: (hidden, dim), b2: (1, dim)."""
    gamma, beta, w1, b1, w2, b2 = params
    dim = x.shape[-1]
    hidden = w1.shape[1]
    out_dtype = x.dtype

    # Flatten all leading dims onto one row axis; tile it.
    x2d = x.reshape(-1, dim)
    M = x2d.shape[0]
    TM = int(min(tile_m, _round_up(M, 8)))       # multiple of 8 sublanes
    Mp = _round_up(M, TM)
    if Mp != M:
        x2d = jnp.pad(x2d, ((0, Mp - M), (0, 0)))

    # Optional bf16 operands for the matmuls (cast at the HBM boundary so DMA
    # traffic is halved too); accumulation stays f32 inside the kernel.
    x2d = x2d.astype(matmul_dtype)
    w1c = w1.astype(matmul_dtype)
    w2c = w2.astype(matmul_dtype)

    kernel = functools.partial(_ffn_kernel, eps=eps)
    out = pl.pallas_call(
        kernel,
        out_shape=jax.ShapeDtypeStruct((Mp, dim), out_dtype),
        grid=(Mp // TM,),
        in_specs=[
            pl.BlockSpec((TM, dim), lambda i: (i, 0)),      # x tile
            pl.BlockSpec((1, dim), lambda i: (0, 0)),       # gamma
            pl.BlockSpec((1, dim), lambda i: (0, 0)),       # beta
            pl.BlockSpec((dim, hidden), lambda i: (0, 0)),  # w1 (resident)
            pl.BlockSpec((1, hidden), lambda i: (0, 0)),    # b1
            pl.BlockSpec((hidden, dim), lambda i: (0, 0)),  # w2 (resident)
            pl.BlockSpec((1, dim), lambda i: (0, 0)),       # b2
        ],
        out_specs=pl.BlockSpec((TM, dim), lambda i: (i, 0)),
        compiler_params=pltpu.CompilerParams(
            dimension_semantics=("parallel",)),             # shard tiles on v7x TCs
    )(x2d, gamma, beta, w1c, b1, w2c, b2)

    if Mp != M:
        out = out[:M]
    return out.reshape(x.shape)


# ----------------------------------------------------------------------------
# Pure-JAX reference (same math, for correctness checking)
# ----------------------------------------------------------------------------
def feedforward_reference(x, params, eps=1e-5):
    gamma, beta, w1, b1, w2, b2 = params
    mean = jnp.mean(x, axis=-1, keepdims=True)
    var = jnp.mean((x - mean) ** 2, axis=-1, keepdims=True)
    xn = (x - mean) / jnp.sqrt(var + eps)
    xn = xn * gamma.reshape(-1) + beta.reshape(-1)
    h = xn @ w1 + b1.reshape(-1)
    h = 0.5 * h * (1.0 + jnp.tanh(_SQRT_2_OVER_PI * (h + 0.044715 * h ** 3)))
    return h @ w2 + b2.reshape(-1)


if __name__ == "__main__":
    # FeedForward(dim=128, hidden_dim=256), input (batch=2, seq=512, dim=128).
    # dim / hidden are multiples of 128 (lane-dense); M = 1024 -> 4 row tiles.
    B, S, dim, hidden = 2, 512, 128, 256

    key = jax.random.PRNGKey(0)
    ks = jax.random.split(key, 7)

    # PyTorch Linear weights are (out, in); we store them transposed (in, out)
    # ready for the channels-last matmul.
    gamma = 1.0 + 0.1 * jax.random.normal(ks[0], (1, dim), jnp.float32)
    beta = 0.1 * jax.random.normal(ks[1], (1, dim), jnp.float32)
    w1 = jax.random.normal(ks[2], (dim, hidden), jnp.float32) / np.sqrt(dim)
    b1 = 0.1 * jax.random.normal(ks[3], (1, hidden), jnp.float32)
    w2 = jax.random.normal(ks[4], (hidden, dim), jnp.float32) / np.sqrt(hidden)
    b2 = 0.1 * jax.random.normal(ks[5], (1, dim), jnp.float32)
    params = (gamma, beta, w1, b1, w2, b2)

    x = jax.random.normal(ks[6], (B, S, dim), jnp.float32)

    ref = jax.block_until_ready(feedforward_reference(x, params))

    # f32 matmuls: tight tolerance.
    out_f32 = jax.block_until_ready(
        feedforward_forward(x, params, tile_m=256, matmul_dtype=jnp.float32))
    np.testing.assert_allclose(np.asarray(out_f32), np.asarray(ref),
                               rtol=1e-4, atol=1e-4)

    # bf16 matmul operands + f32 accumulation (bandwidth/MXU optimization).
    out_bf16 = jax.block_until_ready(
        feedforward_forward(x, params, tile_m=256, matmul_dtype=jnp.bfloat16))
    np.testing.assert_allclose(np.asarray(out_bf16), np.asarray(ref),
                               rtol=3e-2, atol=3e-2)

    print("KERNEL_OK")
</pallas_src>

<mosaic_0001>
module attributes {stable_mosaic.version = 11 : i64} {
  func.func @_ffn_kernel(%arg0: i32, %arg1: memref<256x128xf32, #tpu.memory_space<vmem>>, %arg2: memref<1x128xf32, #tpu.memory_space<vmem>>, %arg3: memref<1x128xf32, #tpu.memory_space<vmem>>, %arg4: memref<128x256xf32, #tpu.memory_space<vmem>>, %arg5: memref<1x256xf32, #tpu.memory_space<vmem>>, %arg6: memref<256x128xf32, #tpu.memory_space<vmem>>, %arg7: memref<1x128xf32, #tpu.memory_space<vmem>>, %arg8: memref<256x128xf32, #tpu.memory_space<vmem>>) attributes {dimension_semantics = [#tpu.dimension_semantics<parallel>], iteration_bounds = array<i64: 4>, scalar_prefetch = 0 : i64, scratch_operands = 0 : i64, tpu.core_type = #tpu.core_type<tc>, window_params = [{transform_indices = @transform_0, window_bounds = array<i64: 256, 128>}, {pipeline_mode = #tpu.pipeline_mode<synchronous>, transform_indices = @transform_1, window_bounds = array<i64: 1, 128>}, {pipeline_mode = #tpu.pipeline_mode<synchronous>, transform_indices = @transform_2, window_bounds = array<i64: 1, 128>}, {pipeline_mode = #tpu.pipeline_mode<synchronous>, transform_indices = @transform_3, window_bounds = array<i64: 128, 256>}, {pipeline_mode = #tpu.pipeline_mode<synchronous>, transform_indices = @transform_4, window_bounds = array<i64: 1, 256>}, {pipeline_mode = #tpu.pipeline_mode<synchronous>, transform_indices = @transform_5, window_bounds = array<i64: 256, 128>}, {pipeline_mode = #tpu.pipeline_mode<synchronous>, transform_indices = @transform_6, window_bounds = array<i64: 1, 128>}, {transform_indices = @transform_7, window_bounds = array<i64: 256, 128>}]} {
    %c0 = arith.constant 0 : index
    %c0_0 = arith.constant 0 : index
    %0 = vector.load %arg1[%c0, %c0_0] : memref<256x128xf32, #tpu.memory_space<vmem>>, vector<256x128xf32>
    %cst = arith.constant dense<0.000000e+00> : vector<256xf32>
    %1 = vector.multi_reduction <add>, %0, %cst [1] : vector<256x128xf32> to vector<256xf32>
    %2 = vector.shape_cast %1 : vector<256xf32> to vector<256x1xf32>
    %cst_1 = arith.constant 1.280000e+02 : f32
    %3 = vector.broadcast %cst_1 : f32 to vector<256x1xf32>
    %4 = arith.divf %2, %3 : vector<256x1xf32>
    %5 = vector.broadcast %4 : vector<256x1xf32> to vector<256x128xf32>
    %6 = arith.subf %0, %5 : vector<256x128xf32>
    %7 = arith.mulf %6, %6 : vector<256x128xf32>
    %cst_2 = arith.constant dense<0.000000e+00> : vector<256xf32>
    %8 = vector.multi_reduction <add>, %7, %cst_2 [1] : vector<256x128xf32> to vector<256xf32>
    %9 = vector.shape_cast %8 : vector<256xf32> to vector<256x1xf32>
    %cst_3 = arith.constant 1.280000e+02 : f32
    %10 = vector.broadcast %cst_3 : f32 to vector<256x1xf32>
    %11 = arith.divf %9, %10 : vector<256x1xf32>
    %cst_4 = arith.constant 9.99999974E-6 : f32
    %12 = vector.broadcast %cst_4 : f32 to vector<256x1xf32>
    %13 = arith.addf %11, %12 : vector<256x1xf32>
    %14 = math.rsqrt %13 : vector<256x1xf32>
    %15 = vector.broadcast %14 : vector<256x1xf32> to vector<256x128xf32>
    %16 = arith.mulf %6, %15 : vector<256x128xf32>
    %c0_5 = arith.constant 0 : index
    %c0_6 = arith.constant 0 : index
    %17 = vector.load %arg2[%c0_5, %c0_6] : memref<1x128xf32, #tpu.memory_space<vmem>>, vector<1x128xf32>
    %18 = vector.broadcast %17 : vector<1x128xf32> to vector<256x128xf32>
    %19 = arith.mulf %16, %18 : vector<256x128xf32>
    %c0_7 = arith.constant 0 : index
    %c0_8 = arith.constant 0 : index
    %20 = vector.load %arg3[%c0_7, %c0_8] : memref<1x128xf32, #tpu.memory_space<vmem>>, vector<1x128xf32>
    %21 = vector.broadcast %20 : vector<1x128xf32> to vector<256x128xf32>
    %22 = arith.addf %19, %21 : vector<256x128xf32>
    %c0_9 = arith.constant 0 : index
    %c0_10 = arith.constant 0 : index
    %23 = vector.load %arg4[%c0_9, %c0_10] : memref<128x256xf32, #tpu.memory_space<vmem>>, vector<128x256xf32>
    %cst_11 = arith.constant dense<0.000000e+00> : vector<256x256xf32>
    %24 = tpu.matmul %22, %23, %cst_11 {dimension_numbers = #tpu.dot_dimension_numbers<[1], [0], [0], [1], [0, 0, 1, 1], [], []>} : vector<256x128xf32>, vector<128x256xf32>, vector<256x256xf32> -> vector<256x256xf32>
    %c0_12 = arith.constant 0 : index
    %c0_13 = arith.constant 0 : index
    %25 = vector.load %arg5[%c0_12, %c0_13] : memref<1x256xf32, #tpu.memory_space<vmem>>, vector<1x256xf32>
    %26 = vector.broadcast %25 : vector<1x256xf32> to vector<256x256xf32>
    %27 = arith.addf %24, %26 : vector<256x256xf32>
    %cst_14 = arith.constant 5.000000e-01 : f32
    %28 = vector.broadcast %cst_14 : f32 to vector<256x256xf32>
    %29 = arith.mulf %28, %27 : vector<256x256xf32>
    %cst_15 = arith.constant 4.471500e-02 : f32
    %30 = vector.broadcast %cst_15 : f32 to vector<256x256xf32>
    %31 = arith.mulf %30, %27 : vector<256x256xf32>
    %32 = arith.mulf %31, %27 : vector<256x256xf32>
    %33 = arith.mulf %32, %27 : vector<256x256xf32>
    %34 = arith.addf %27, %33 : vector<256x256xf32>
    %cst_16 = arith.constant 0.797884583 : f32
    %35 = vector.broadcast %cst_16 : f32 to vector<256x256xf32>
    %36 = arith.mulf %35, %34 : vector<256x256xf32>
    %37 = math.tanh %36 : vector<256x256xf32>
    %cst_17 = arith.constant 1.000000e+00 : f32
    %38 = vector.broadcast %cst_17 : f32 to vector<256x256xf32>
    %39 = arith.addf %38, %37 : vector<256x256xf32>
    %40 = arith.mulf %29, %39 : vector<256x256xf32>
    %c0_18 = arith.constant 0 : index
    %c0_19 = arith.constant 0 : index
    %41 = vector.load %arg6[%c0_18, %c0_19] : memref<256x128xf32, #tpu.memory_space<vmem>>, vector<256x128xf32>
    %cst_20 = arith.constant dense<0.000000e+00> : vector<256x128xf32>
    %42 = tpu.matmul %40, %41, %cst_20 {dimension_numbers = #tpu.dot_dimension_numbers<[1], [0], [0], [1], [0, 0, 1, 1], [], []>} : vector<256x256xf32>, vector<256x128xf32>, vector<256x128xf32> -> vector<256x128xf32>
    %c0_21 = arith.constant 0 : index
    %c0_22 = arith.constant 0 : index
    %43 = vector.load %arg7[%c0_21, %c0_22] : memref<1x128xf32, #tpu.memory_space<vmem>>, vector<1x128xf32>
    %44 = vector.broadcast %43 : vector<1x128xf32> to vector<256x128xf32>
    %45 = arith.addf %42, %44 : vector<256x128xf32>
    %c0_23 = arith.constant 0 : index
    %c0_24 = arith.constant 0 : index
    %46 = vector.load %arg8[%c0_23, %c0_24] : memref<256x128xf32, #tpu.memory_space<vmem>>, vector<256x128xf32>
    tpu.vector_store %arg8[%c0_23, %c0_24], %45 {strides = array<i32>} : memref<256x128xf32, #tpu.memory_space<vmem>>, vector<256x128xf32>,
    return
  }
  func.func @transform_0(%arg0: i32) -> (i32, i32) {
    %c0_i32 = arith.constant 0 : i32
    %c0_i32_0 = arith.constant 0 : i32
    return %arg0, %c0_i32 : i32, i32
  }
  func.func @transform_1(%arg0: i32) -> (i32, i32) {
    %c0_i32 = arith.constant 0 : i32
    %c0_i32_0 = arith.constant 0 : i32
    %c0_i32_1 = arith.constant 0 : i32
    return %c0_i32, %c0_i32_0 : i32, i32
  }
  func.func @transform_2(%arg0: i32) -> (i32, i32) {
    %c0_i32 = arith.constant 0 : i32
    %c0_i32_0 = arith.constant 0 : i32
    %c0_i32_1 = arith.constant 0 : i32
    return %c0_i32, %c0_i32_0 : i32, i32
  }
  func.func @transform_3(%arg0: i32) -> (i32, i32) {
    %c0_i32 = arith.constant 0 : i32
    %c0_i32_0 = arith.constant 0 : i32
    %c0_i32_1 = arith.constant 0 : i32
    return %c0_i32, %c0_i32_0 : i32, i32
  }
  func.func @transform_4(%arg0: i32) -> (i32, i32) {
    %c0_i32 = arith.constant 0 : i32
    %c0_i32_0 = arith.constant 0 : i32
    %c0_i32_1 = arith.constant 0 : i32
    return %c0_i32, %c0_i32_0 : i32, i32
  }
  func.func @transform_5(%arg0: i32) -> (i32, i32) {
    %c0_i32 = arith.constant 0 : i32
    %c0_i32_0 = arith.constant 0 : i32
    %c0_i32_1 = arith.constant 0 : i32
    return %c0_i32, %c0_i32_0 : i32, i32
  }
  func.func @transform_6(%arg0: i32) -> (i32, i32) {
    %c0_i32 = arith.constant 0 : i32
    %c0_i32_0 = arith.constant 0 : i32
    %c0_i32_1 = arith.constant 0 : i32
    return %c0_i32, %c0_i32_0 : i32, i32
  }
  func.func @transform_7(%arg0: i32) -> (i32, i32) {
    %c0_i32 = arith.constant 0 : i32
    %c0_i32_0 = arith.constant 0 : i32
    return %arg0, %c0_i32 : i32, i32
  }
}

</mosaic_0001>

<llo_original>
// kernel: tpu_custom_call.1
$region0: #{tpu_custom_call.1}
  #allocation0 [shape = 'u32[]', space=smem, size = 0x4, offset = 0x4, fixed_abs, tag = 'smem constant byte address 0x4 - core index']
  #allocation1 [shape = 'u32[144,128]{1,0:T(1,128)}', space=vmem, size = 0x12000, scoped, tag = 'internal scratch']
  %s0 = inlined_call_operand.hbm [shape: f32[1024,128], index: 0, kind: input, shape index: {}]
  %s1 = inlined_call_operand.vmem [shape: f32[1,128], index: 1, kind: input, shape index: {}]
  %s2 = inlined_call_operand.vmem [shape: f32[1,128], index: 2, kind: input, shape index: {}]
  %s3 = inlined_call_operand.hbm [shape: f32[128,256], index: 3, kind: input, shape index: {}]
  %s4 = inlined_call_operand.vmem [shape: f32[1,256], index: 4, kind: input, shape index: {}]
  %s5 = inlined_call_operand.hbm [shape: f32[256,128], index: 5, kind: input, shape index: {}]
  %s6 = inlined_call_operand.vmem [shape: f32[1,128], index: 6, kind: input, shape index: {}]
  %s7 = inlined_call_operand.hbm [shape: f32[1024,128], index: 7, kind: output, shape index: {}]
  %s8 = sld [smem:[#allocation0]]
  $region73: #{tpu_custom_call.1} parent=0
    _
  %s10 = ssub.s32 1, %s8
  %s11 = scalar_select 0, %s10, %s8
  $region1: #{tpu_custom_call.1} parent=0
    #allocation2 [shape = 'u8[262144]{0}', space=vmem, size = 0x40000, scoped, tag = 'input window, operand 0']
    #allocation3 [shape = 's32[2]{0}', space=sflag, size = 0x8, scoped, tag = 'scoped memory for tpu_custom_call.1']
    #allocation4 [shape = 's32[2]{0}', space=sflag, size = 0x8, scoped, tag = 'scoped memory for tpu_custom_call.1']
    #allocation5 [shape = 'u8[131072]{0}', space=vmem, size = 0x20000, scoped, tag = 'input window, operand 3, single buffered']
    #allocation6 [shape = 's32[1]{0}', space=sflag, size = 0x4, scoped, tag = 'scoped memory for tpu_custom_call.1']
    #allocation7 [shape = 'u8[131072]{0}', space=vmem, size = 0x20000, scoped, tag = 'input window, operand 5, single buffered']
    #allocation8 [shape = 'u8[262144]{0}', space=vmem, size = 0x40000, scoped, tag = 'output window, operand 0']
    %12 = vsyncpa [#allocation3], 0
    %s13 = scalar_lea.sflag [#allocation3], 1
    %14 = vsyncpa %s13, 0
    %15 = vsyncpa [#allocation6], 0
    %16 = vsyncpa [#allocation4], 0
    %s17 = scalar_lea.sflag [#allocation4], 1
    %18 = vsyncpa %s17, 0
    loop: start=0, step=1, limit=6
    $region2: #{tpu_custom_call.1} parent=1 // loop_pre_header
      _
    $region3: #{tpu_custom_call.1} parent=1 // loop_header
      %s20 = sphi 0, %s24
      %p21 = scmp.ge.s32.totalorder %s20, 6
      %s30 = sphi 0, %s32
      %s33 = sphi 0, %s30
      %s34 = sphi 0, %s33
      %s50 = sphi 0, %s34
      %s54 = sphi 0, %s54
      %s56 = sphi 0, %s54
      %s57 = sphi 0, %s56
      %s71 = sphi 0, %s57
      %s75 = sphi 0, %s75
      %s77 = sphi 0, %s75
      %s78 = sphi 0, %s77
      %s92 = sphi 0, %s78
      %s96 = sphi 0, %s96
      %s98 = sphi 0, %s96
      %s99 = sphi 0, %s98
      %s113 = sphi 0, %s99
      %s117 = sphi 0, %s117
      %s119 = sphi 0, %s117
      %s120 = sphi 0, %s119
      %s134 = sphi 0, %s120
      %s138 = sphi 0, %s138
      %s140 = sphi 0, %s138
      %s141 = sphi 0, %s140
      %s155 = sphi 0, %s141
      %s159 = sphi 0, %s159
      %s161 = sphi 0, %s159
      %s162 = sphi 0, %s161
      %s176 = sphi 0, %s162
      %s182 = sphi 0, %s184
      %s185 = sphi 0, %s182
      %s186 = sphi 0, %s185
      %s202 = sphi 0, %s186
    $region4: #{tpu_custom_call.1} parent=1 // loop_header_branch
      %23 = sbr.rel (%p21) target = $region8
    $region5: #{tpu_custom_call.1} parent=1 // loop_body
      %s25 = ssub.s32 %s20, 1
      %s26 = ssub.s32 %s20, 2
      %s27 = sadd.s32 %s20, 1
      %s28 = ssub.s32 %s20, %s27
      %p29 = scmp.eq.s32.totalorder %s28, 0
      %s31 = sadd.s32 %s30, 1
      %s32 = scalar_select %p29, %s30, %s31
      %p35 = pneg %p29
      %p36 = scmp.eq.s32.totalorder %s20, 3
      %p37 = por %p35, %p36
      %p38 = scmp.ne.s32.totalorder %s30, %s33
      %p39 = scmp.eq.s32.totalorder %s20, 0
      %p40 = por %p38, %p39
      %p41 = scmp.ne.s32.totalorder %s30, %s33
      %p42 = scmp.eq.s32.totalorder %s25, 3
      %p43 = por %p41, %p42
      %p44 = scmp.ne.s32.totalorder %s33, %s34
      %p45 = scmp.eq.s32.totalorder %s25, 0
      %p46 = por %p44, %p45
      %p47 = scmp.ne.s32.totalorder %s33, %s34
      %p48 = scmp.eq.s32.totalorder %s26, 3
      %p49 = por %p47, %p48
      %p51 = scmp.ne.s32.totalorder %s34, %s50
      %p52 = scmp.eq.s32.totalorder %s26, 0
      %p53 = por %p51, %p52
      %s55 = sadd.s32 %s54, 1
      %p58 = scmp.eq.s32.totalorder %s20, 3
      %p59 = scmp.ne.s32.totalorder %s54, %s56
      %p60 = scmp.eq.s32.totalorder %s20, 0
      %p61 = por %p59, %p60
      %p62 = scmp.ne.s32.totalorder %s54, %s56
      %p63 = scmp.eq.s32.totalorder %s25, 3
      %p64 = por %p62, %p63
      %p65 = scmp.ne.s32.totalorder %s56, %s57
      %p66 = scmp.eq.s32.totalorder %s25, 0
      %p67 = por %p65, %p66
      %p68 = scmp.ne.s32.totalorder %s56, %s57
      %p69 = scmp.eq.s32.totalorder %s26, 3
      %p70 = por %p68, %p69
      %p72 = scmp.ne.s32.totalorder %s57, %s71
      %p73 = scmp.eq.s32.totalorder %s26, 0
      %p74 = por %p72, %p73
      %s76 = sadd.s32 %s75, 1
      %p79 = scmp.eq.s32.totalorder %s20, 3
      %p80 = scmp.ne.s32.totalorder %s75, %s77
      %p81 = scmp.eq.s32.totalorder %s20, 0
      %p82 = por %p80, %p81
      %p83 = scmp.ne.s32.totalorder %s75, %s77
      %p84 = scmp.eq.s32.totalorder %s25, 3
      %p85 = por %p83, %p84
      %p86 = scmp.ne.s32.totalorder %s77, %s78
      %p87 = scmp.eq.s32.totalorder %s25, 0
      %p88 = por %p86, %p87
      %p89 = scmp.ne.s32.totalorder %s77, %s78
      %p90 = scmp.eq.s32.totalorder %s26, 3
      %p91 = por %p89, %p90
      %p93 = scmp.ne.s32.totalorder %s78, %s92
      %p94 = scmp.eq.s32.totalorder %s26, 0
      %p95 = por %p93, %p94
      %s97 = sadd.s32 %s96, 1
      %p100 = scmp.eq.s32.totalorder %s20, 3
      %p101 = scmp.ne.s32.totalorder %s96, %s98
      %p102 = scmp.eq.s32.totalorder %s20, 0
      %p103 = por %p101, %p102
      %p104 = scmp.ne.s32.totalorder %s96, %s98
      %p105 = scmp.eq.s32.totalorder %s25, 3
      %p106 = por %p104, %p105
      %p107 = scmp.ne.s32.totalorder %s98, %s99
      %p108 = scmp.eq.s32.totalorder %s25, 0
      %p109 = por %p107, %p108
      %p110 = scmp.ne.s32.totalorder %s98, %s99
      %p111 = scmp.eq.s32.totalorder %s26, 3
      %p112 = por %p110, %p111
      %p114 = scmp.ne.s32.totalorder %s99, %s113
      %p115 = scmp.eq.s32.totalorder %s26, 0
      %p116 = por %p114, %p115
      %s118 = sadd.s32 %s117, 1
      %p121 = scmp.eq.s32.totalorder %s20, 3
      %p122 = scmp.ne.s32.totalorder %s117, %s119
      %p123 = scmp.eq.s32.totalorder %s20, 0
      %p124 = por %p122, %p123
      %p125 = scmp.ne.s32.totalorder %s117, %s119
      %p126 = scmp.eq.s32.totalorder %s25, 3
      %p127 = por %p125, %p126
      %p128 = scmp.ne.s32.totalorder %s119, %s120
      %p129 = scmp.eq.s32.totalorder %s25, 0
      %p130 = por %p128, %p129
      %p131 = scmp.ne.s32.totalorder %s119, %s120
      %p132 = scmp.eq.s32.totalorder %s26, 3
      %p133 = por %p131, %p132
      %p135 = scmp.ne.s32.totalorder %s120, %s134
      %p136 = scmp.eq.s32.totalorder %s26, 0
      %p137 = por %p135, %p136
      %s139 = sadd.s32 %s138, 1
      %p142 = scmp.eq.s32.totalorder %s20, 3
      %p143 = scmp.ne.s32.totalorder %s138, %s140
      %p144 = scmp.eq.s32.totalorder %s20, 0
      %p145 = por %p143, %p144
      %p146 = scmp.ne.s32.totalorder %s138, %s140
      %p147 = scmp.eq.s32.totalorder %s25, 3
      %p148 = por %p146, %p147
      %p149 = scmp.ne.s32.totalorder %s140, %s141
      %p150 = scmp.eq.s32.totalorder %s25, 0
      %p151 = por %p149, %p150
      %p152 = scmp.ne.s32.totalorder %s140, %s141
      %p153 = scmp.eq.s32.totalorder %s26, 3
      %p154 = por %p152, %p153
      %p156 = scmp.ne.s32.totalorder %s141, %s155
      %p157 = scmp.eq.s32.totalorder %s26, 0
      %p158 = por %p156, %p157
      %s160 = sadd.s32 %s159, 1
      %p163 = scmp.eq.s32.totalorder %s20, 3
      %p164 = scmp.ne.s32.totalorder %s159, %s161
      %p165 = scmp.eq.s32.totalorder %s20, 0
      %p166 = por %p164, %p165
      %p167 = scmp.ne.s32.totalorder %s159, %s161
      %p168 = scmp.eq.s32.totalorder %s25, 3
      %p169 = por %p167, %p168
      %p170 = scmp.ne.s32.totalorder %s161, %s162
      %p171 = scmp.eq.s32.totalorder %s25, 0
      %p172 = por %p170, %p171
      %p173 = scmp.ne.s32.totalorder %s161, %s162
      %p174 = scmp.eq.s32.totalorder %s26, 3
      %p175 = por %p173, %p174
      %p177 = scmp.ne.s32.totalorder %s162, %s176
      %p178 = scmp.eq.s32.totalorder %s26, 0
      %p179 = por %p177, %p178
      %s180 = ssub.s32 %s20, %s27
      %p181 = scmp.eq.s32.totalorder %s180, 0
      %s183 = sadd.s32 %s182, 1
      %s184 = scalar_select %p181, %s182, %s183
      %p187 = pneg %p181
      %p188 = scmp.eq.s32.totalorder %s20, 3
      %p189 = por %p187, %p188
      %p190 = scmp.ne.s32.totalorder %s182, %s185
      %p191 = scmp.eq.s32.totalorder %s20, 0
      %p192 = por %p190, %p191
      %p193 = scmp.ne.s32.totalorder %s182, %s185
      %p194 = scmp.eq.s32.totalorder %s25, 3
      %p195 = por %p193, %p194
      %p196 = scmp.ne.s32.totalorder %s185, %s186
      %p197 = scmp.eq.s32.totalorder %s25, 0
      %p198 = por %p196, %p197
      %p199 = scmp.ne.s32.totalorder %s185, %s186
      %p200 = scmp.eq.s32.totalorder %s26, 3
      %p201 = por %p199, %p200
      %p203 = scmp.ne.s32.totalorder %s186, %s202
      %p204 = scmp.eq.s32.totalorder %s26, 0
      %p205 = por %p203, %p204
      %p206 = scmp.le.s32.totalorder 1, %s20
      %p207 = scmp.lt.s32.totalorder %s20, 5
      %p208 = pnand %p206, %p207
      %p209 = pneg %p208
      // Predicated region
      $region9: #{tpu_custom_call.1} parent=5 // pred_check
        _
      $region10: #{tpu_custom_call.1} parent=5 // pred_check_branch
        %211 = sbr.rel (%p208) target = $region12
      $region11: #{tpu_custom_call.1} parent=5 // pred_region
        %s212 = ssub.s32 %s20, 1
        // Predicated region
        $region13: #{tpu_custom_call.1} parent=11 // pred_check
          %p213 = pneg %p67
        $region14: #{tpu_custom_call.1} parent=11 // pred_check_branch
          %215 = sbr.rel (%p213) target = $region16
        $region15: #{tpu_custom_call.1} parent=11 // pred_region
          _
        $region16: #{tpu_custom_call.1} parent=11 // pred_fallthru
          _
        // Predicated region
        $region17: #{tpu_custom_call.1} parent=11 // pred_check
          %p216 = pneg %p88
        $region18: #{tpu_custom_call.1} parent=11 // pred_check_branch
          %218 = sbr.rel (%p216) target = $region20
        $region19: #{tpu_custom_call.1} parent=11 // pred_region
          _
        $region20: #{tpu_custom_call.1} parent=11 // pred_fallthru
          _
        // Predicated region
        $region21: #{tpu_custom_call.1} parent=11 // pred_check
          %p219 = pneg %p109
        $region22: #{tpu_custom_call.1} parent=11 // pred_check_branch
          %221 = sbr.rel (%p219) target = $region24
        $region23: #{tpu_custom_call.1} parent=11 // pred_region
          %s223 = ssub.s32 4096, 4096
          %224 = vsyncadd [#allocation6], %s223
          %s225 = sshll.u32 [#allocation5], 4
          %s226 = int_to_ptr.vmem [resolvable:$true] %s225
          %231 = dma.hbm_to_vmem [thread:$0]  %s3, 4096, %s226, [#allocation6], 256, 256, 16
        $region24: #{tpu_custom_call.1} parent=11 // pred_fallthru
          _
        // Predicated region
        $region25: #{tpu_custom_call.1} parent=11 // pred_check
          %p232 = pneg %p130
        $region26: #{tpu_custom_call.1} parent=11 // pred_check_branch
          %234 = sbr.rel (%p232) target = $region28
        $region27: #{tpu_custom_call.1} parent=11 // pred_region
          _
        $region28: #{tpu_custom_call.1} parent=11 // pred_fallthru
          _
        // Predicated region
        $region29: #{tpu_custom_call.1} parent=11 // pred_check
          %p235 = pneg %p151
        $region30: #{tpu_custom_call.1} parent=11 // pred_check_branch
          %237 = sbr.rel (%p235) target = $region32
        $region31: #{tpu_custom_call.1} parent=11 // pred_region
          %s239 = ssub.s32 4096, 4096
          %240 = vsyncadd [#allocation6], %s239
          %s241 = sshll.u32 [#allocation7], 4
          %s242 = int_to_ptr.vmem [resolvable:$true] %s241
          %247 = dma.hbm_to_vmem [thread:$0]  %s5, 4096, %s242, [#allocation6], 128, 128, 8
        $region32: #{tpu_custom_call.1} parent=11 // pred_fallthru
          _
        // Predicated region
        $region33: #{tpu_custom_call.1} parent=11 // pred_check
          %p248 = pneg %p172
        $region34: #{tpu_custom_call.1} parent=11 // pred_check_branch
          %250 = sbr.rel (%p248) target = $region36
        $region35: #{tpu_custom_call.1} parent=11 // pred_region
          _
        $region36: #{tpu_custom_call.1} parent=11 // pred_fallthru
          _
      $region12: #{tpu_custom_call.1} parent=5 // pred_fallthru
        _
      %p251 = scmp.lt.s32.totalorder %s20, 4
      // Predicated region
      $region37: #{tpu_custom_call.1} parent=5 // pred_check
        %p252 = pneg %p251
      $region38: #{tpu_custom_call.1} parent=5 // pred_check_branch
        %254 = sbr.rel (%p252) target = $region40
      $region39: #{tpu_custom_call.1} parent=5 // pred_region
        // Predicated region
        $region41: #{tpu_custom_call.1} parent=39 // pred_check
          %p255 = pneg %p40
        $region42: #{tpu_custom_call.1} parent=39 // pred_check_branch
          %257 = sbr.rel (%p255) target = $region44
        $region43: #{tpu_custom_call.1} parent=39 // pred_region
          %s258 = sand.u32 %s30, 1
          %s259 = scalar_lea.sflag [#allocation3], %s258
          %s260 = sand.u32 %s30, 1
          %s261 = smul.addr %s260, 256
          %s262 = scalar_lea.vmem [#allocation2], %s261
          %s263 = smul.u32 32, %s20
          %s265 = ssub.s32 4096, 4096
          %266 = vsyncadd %s259, %s265
          %s267 = smul.addr %s263, 128
          %s268 = scalar_lea.hbm %s0, %s267
          %s269 = sshll.u32 %s262, 4
          %s270 = int_to_ptr.vmem [resolvable:$true] %s269
          %275 = dma.hbm_to_vmem [thread:$0]  %s268, 4096, %s270, %s259, 128, 128, 8
        $region44: #{tpu_custom_call.1} parent=39 // pred_fallthru
          _
      $region40: #{tpu_custom_call.1} parent=5 // pred_fallthru
        _
      %p276 = scmp.le.s32.totalorder 1, %s20
      %p277 = scmp.lt.s32.totalorder %s20, 5
      %p278 = pnand %p276, %p277
      %p279 = pneg %p278
      // Predicated region
      $region45: #{tpu_custom_call.1} parent=5 // pred_check
        _
      $region46: #{tpu_custom_call.1} parent=5 // pred_check_branch
        %281 = sbr.rel (%p278) target = $region48
      $region47: #{tpu_custom_call.1} parent=5 // pred_region
        %s282 = ssub.s32 %s20, 1
        %s283 = sand.u32 %s33, 1
        %s284 = scalar_lea.sflag [#allocation3], %s283
        %s285 = sand.u32 %s33, 1
        %s286 = smul.addr %s285, 256
        %s287 = scalar_lea.vmem [#allocation2], %s286
        // Predicated region
        $region49: #{tpu_custom_call.1} parent=47 // pred_check
          %p288 = pneg %p46
        $region50: #{tpu_custom_call.1} parent=47 // pred_check_branch
          %290 = sbr.rel (%p288) target = $region52
        $region51: #{tpu_custom_call.1} parent=47 // pred_region
          %291 = dma.done %s284, 4096
        $region52: #{tpu_custom_call.1} parent=47 // pred_fallthru
          _
        // Predicated region
        $region53: #{tpu_custom_call.1} parent=47 // pred_check
          %p292 = pneg %p109
        $region54: #{tpu_custom_call.1} parent=47 // pred_check_branch
          %294 = sbr.rel (%p292) target = $region56
        $region55: #{tpu_custom_call.1} parent=47 // pred_region
          %295 = dma.done [#allocation6], 4096
        $region56: #{tpu_custom_call.1} parent=47 // pred_fallthru
          _
        // Predicated region
        $region57: #{tpu_custom_call.1} parent=47 // pred_check
          %p296 = pneg %p151
        $region58: #{tpu_custom_call.1} parent=47 // pred_check_branch
          %298 = sbr.rel (%p296) target = $region60
        $region59: #{tpu_custom_call.1} parent=47 // pred_region
          %299 = dma.done [#allocation6], 4096
        $region60: #{tpu_custom_call.1} parent=47 // pred_fallthru
          _
        %s300 = sand.u32 %s33, 1
        %s301 = scalar_lea.sflag [#allocation3], %s300
        %s302 = sand.u32 %s33, 1
        %s303 = smul.addr %s302, 256
        %s304 = scalar_lea.vmem [#allocation2], %s303
        %p305 = pneg %p46
        %p306 = pneg %p43
        %p307 = pneg %p67
        %p308 = pneg %p64
        %p309 = pneg %p88
        %p310 = pneg %p85
        %p311 = pneg %p109
        %p312 = pneg %p106
        %p313 = pneg %p130
        %p314 = pneg %p127
        %p315 = pneg %p151
        %p316 = pneg %p148
        %p317 = pneg %p172
        %p318 = pneg %p169
        %p319 = pneg %p198
        %p320 = pneg %p195
        %s321 = sand.u32 %s185, 1
        %s322 = scalar_lea.sflag [#allocation4], %s321
        %s323 = sand.u32 %s185, 1
        %s324 = smul.addr %s323, 256
        %s325 = scalar_lea.vmem [#allocation8], %s324
        %s326 = smul.u32 32, %s25
        %s327 = smul.u32 32, %s25
        %v328 = vld [vmem:[%s287] sm:$0xff]
        %v329 = vld [vmem:[%s287 + $0x8] sm:$0xff]
        %v330 = vld [vmem:[%s287 + $0x10] sm:$0xff]
        %v331 = vld [vmem:[%s287 + $0x18] sm:$0xff]
        %v332 = vld [vmem:[%s287 + $0x20] sm:$0xff]
        %v333 = vld [vmem:[%s287 + $0x28] sm:$0xff]
        %v334 = vld [vmem:[%s287 + $0x30] sm:$0xff]
        %v335 = vld [vmem:[%s287 + $0x38] sm:$0xff]
        %v336 = vld [vmem:[%s287 + $0x40] sm:$0xff]
        %v337 = vld [vmem:[%s287 + $0x48] sm:$0xff]
        %v338 = vld [vmem:[%s287 + $0x50] sm:$0xff]
        %v339 = vld [vmem:[%s287 + $0x58] sm:$0xff]
        %v340 = vld [vmem:[%s287 + $0x60] sm:$0xff]
        %v341 = vld [vmem:[%s287 + $0x68] sm:$0xff]
        %v342 = vld [vmem:[%s287 + $0x70] sm:$0xff]
        %v343 = vld [vmem:[%s287 + $0x78] sm:$0xff]
        %v344 = vld [vmem:[%s287 + $0x80] sm:$0xff]
        %v345 = vld [vmem:[%s287 + $0x88] sm:$0xff]
        %v346 = vld [vmem:[%s287 + $0x90] sm:$0xff]
        %v347 = vld [vmem:[%s287 + $0x98] sm:$0xff]
        %v348 = vld [vmem:[%s287 + $0xa0] sm:$0xff]
        %v349 = vld [vmem:[%s287 + $0xa8] sm:$0xff]
        %v350 = vld [vmem:[%s287 + $0xb0] sm:$0xff]
        %v351 = vld [vmem:[%s287 + $0xb8] sm:$0xff]
        %v352 = vld [vmem:[%s287 + $0xc0] sm:$0xff]
        %v353 = vld [vmem:[%s287 + $0xc8] sm:$0xff]
        %v354 = vld [vmem:[%s287 + $0xd0] sm:$0xff]
        %v355 = vld [vmem:[%s287 + $0xd8] sm:$0xff]
        %v356 = vld [vmem:[%s287 + $0xe0] sm:$0xff]
        %v357 = vld [vmem:[%s287 + $0xe8] sm:$0xff]
        %v358 = vld [vmem:[%s287 + $0xf0] sm:$0xff]
        %v359 = vld [vmem:[%s287 + $0xf8] sm:$0xff]
        %360 = vadd.xlane.f32.xlu0 %v328
        %v361 = vpop.xlane.xlu0 %360
        %362 = vadd.xlane.f32.xlu0 %v329
        %v363 = vpop.xlane.xlu0 %362
        %364 = vadd.xlane.f32.xlu0 %v330
        %v365 = vpop.xlane.xlu0 %364
        %366 = vadd.xlane.f32.xlu0 %v331
        %v367 = vpop.xlane.xlu0 %366
        %368 = vadd.xlane.f32.xlu0 %v332
        %v369 = vpop.xlane.xlu0 %368
        %370 = vadd.xlane.f32.xlu0 %v333
        %v371 = vpop.xlane.xlu0 %370
        %372 = vadd.xlane.f32.xlu0 %v334
        %v373 = vpop.xlane.xlu0 %372
        %374 = vadd.xlane.f32.xlu0 %v335
        %v375 = vpop.xlane.xlu0 %374
        %376 = vadd.xlane.f32.xlu0 %v336
        %v377 = vpop.xlane.xlu0 %376
        %378 = vadd.xlane.f32.xlu0 %v337
        %v379 = vpop.xlane.xlu0 %378
        %380 = vadd.xlane.f32.xlu0 %v338
        %v381 = vpop.xlane.xlu0 %380
        %382 = vadd.xlane.f32.xlu0 %v339
        %v383 = vpop.xlane.xlu0 %382
        %384 = vadd.xlane.f32.xlu0 %v340
        %v385 = vpop.xlane.xlu0 %384
        %386 = vadd.xlane.f32.xlu0 %v341
        %v387 = vpop.xlane.xlu0 %386
        %388 = vadd.xlane.f32.xlu0 %v342
        %v389 = vpop.xlane.xlu0 %388
        %390 = vadd.xlane.f32.xlu0 %v343
        %v391 = vpop.xlane.xlu0 %390
        %392 = vadd.xlane.f32.xlu0 %v344
        %v393 = vpop.xlane.xlu0 %392
        %394 = vadd.xlane.f32.xlu0 %v345
        %v395 = vpop.xlane.xlu0 %394
        %396 = vadd.xlane.f32.xlu0 %v346
        %v397 = vpop.xlane.xlu0 %396
        %398 = vadd.xlane.f32.xlu0 %v347
        %v399 = vpop.xlane.xlu0 %398
        %400 = vadd.xlane.f32.xlu0 %v348
        %v401 = vpop.xlane.xlu0 %400
        %402 = vadd.xlane.f32.xlu0 %v349
        %v403 = vpop.xlane.xlu0 %402
        %404 = vadd.xlane.f32.xlu0 %v350
        %v405 = vpop.xlane.xlu0 %404
        %406 = vadd.xlane.f32.xlu0 %v351
        %v407 = vpop.xlane.xlu0 %406
        %408 = vadd.xlane.f32.xlu0 %v352
        %v409 = vpop.xlane.xlu0 %408
        %410 = vadd.xlane.f32.xlu0 %v353
        %v411 = vpop.xlane.xlu0 %410
        %412 = vadd.xlane.f32.xlu0 %v354
        %v413 = vpop.xlane.xlu0 %412
        %414 = vadd.xlane.f32.xlu0 %v355
        %v415 = vpop.xlane.xlu0 %414
        %416 = vadd.xlane.f32.xlu0 %v356
        %v417 = vpop.xlane.xlu0 %416
        %418 = vadd.xlane.f32.xlu0 %v357
        %v419 = vpop.xlane.xlu0 %418
        %420 = vadd.xlane.f32.xlu0 %v358
        %v421 = vpop.xlane.xlu0 %420
        %422 = vadd.xlane.f32.xlu0 %v359
        %v423 = vpop.xlane.xlu0 %422
        %v424 = vrcp.pop 128.0
        %v425 = vmul.f32 %v361, %v424
        %v426 = vmul.f32 %v363, %v424
        %v427 = vmul.f32 %v365, %v424
        %v428 = vmul.f32 %v367, %v424
        %v429 = vmul.f32 %v369, %v424
        %v430 = vmul.f32 %v371, %v424
        %v431 = vmul.f32 %v373, %v424
        %v432 = vmul.f32 %v375, %v424
        %v433 = vmul.f32 %v377, %v424
        %v434 = vmul.f32 %v379, %v424
        %v435 = vmul.f32 %v381, %v424
        %v436 = vmul.f32 %v383, %v424
        %v437 = vmul.f32 %v385, %v424
        %v438 = vmul.f32 %v387, %v424
        %v439 = vmul.f32 %v389, %v424
        %v440 = vmul.f32 %v391, %v424
        %v441 = vmul.f32 %v393, %v424
        %v442 = vmul.f32 %v395, %v424
        %v443 = vmul.f32 %v397, %v424
        %v444 = vmul.f32 %v399, %v424
        %v445 = vmul.f32 %v401, %v424
        %v446 = vmul.f32 %v403, %v424
        %v447 = vmul.f32 %v405, %v424
        %v448 = vmul.f32 %v407, %v424
        %v449 = vmul.f32 %v409, %v424
        %v450 = vmul.f32 %v411, %v424
        %v451 = vmul.f32 %v413, %v424
        %v452 = vmul.f32 %v415, %v424
        %v453 = vmul.f32 %v417, %v424
        %v454 = vmul.f32 %v419, %v424
        %v455 = vmul.f32 %v421, %v424
        %v456 = vmul.f32 %v423, %v424
        %v457 = vsub.f32 %v328, %v425
        %v458 = vsub.f32 %v329, %v426
        %v459 = vsub.f32 %v330, %v427
        %v460 = vsub.f32 %v331, %v428
        %v461 = vsub.f32 %v332, %v429
        %v462 = vsub.f32 %v333, %v430
        %v463 = vsub.f32 %v334, %v431
        %v464 = vsub.f32 %v335, %v432
        %v465 = vsub.f32 %v336, %v433
        %v466 = vsub.f32 %v337, %v434
        %v467 = vsub.f32 %v338, %v435
        %v468 = vsub.f32 %v339, %v436
        %v469 = vsub.f32 %v340, %v437
        %v470 = vsub.f32 %v341, %v438
        %v471 = vsub.f32 %v342, %v439
        %v472 = vsub.f32 %v343, %v440
        %v473 = vsub.f32 %v344, %v441
        %v474 = vsub.f32 %v345, %v442
        %v475 = vsub.f32 %v346, %v443
        %v476 = vsub.f32 %v347, %v444
        %v477 = vsub.f32 %v348, %v445
        %v478 = vsub.f32 %v349, %v446
        %v479 = vsub.f32 %v350, %v447
        %v480 = vsub.f32 %v351, %v448
        %v481 = vsub.f32 %v352, %v449
        %v482 = vsub.f32 %v353, %v450
        %v483 = vsub.f32 %v354, %v451
        %v484 = vsub.f32 %v355, %v452
        %v485 = vsub.f32 %v356, %v453
        %v486 = vsub.f32 %v357, %v454
        %v487 = vsub.f32 %v358, %v455
        %v488 = vsub.f32 %v359, %v456
        %v489 = vmul.f32 %v457, %v457
        %v490 = vmul.f32 %v458, %v458
        %v491 = vmul.f32 %v459, %v459
        %v492 = vmul.f32 %v460, %v460
        %v493 = vmul.f32 %v461, %v461
        %v494 = vmul.f32 %v462, %v462
        %v495 = vmul.f32 %v463, %v463
        %v496 = vmul.f32 %v464, %v464
        %v497 = vmul.f32 %v465, %v465
        %v498 = vmul.f32 %v466, %v466
        %v499 = vmul.f32 %v467, %v467
        %v500 = vmul.f32 %v468, %v468
        %v501 = vmul.f32 %v469, %v469
        %v502 = vmul.f32 %v470, %v470
        %v503 = vmul.f32 %v471, %v471
        %v504 = vmul.f32 %v472, %v472
        %v505 = vmul.f32 %v473, %v473
        %v506 = vmul.f32 %v474, %v474
        %v507 = vmul.f32 %v475, %v475
        %v508 = vmul.f32 %v476, %v476
        %v509 = vmul.f32 %v477, %v477
        %v510 = vmul.f32 %v478, %v478
        %v511 = vmul.f32 %v479, %v479
        %v512 = vmul.f32 %v480, %v480
        %v513 = vmul.f32 %v481, %v481
        %v514 = vmul.f32 %v482, %v482
        %v515 = vmul.f32 %v483, %v483
        %v516 = vmul.f32 %v484, %v484
        %v517 = vmul.f32 %v485, %v485
        %v518 = vmul.f32 %v486, %v486
        %v519 = vmul.f32 %v487, %v487
        %v520 = vmul.f32 %v488, %v488
        %521 = vadd.xlane.f32.xlu0 %v489
        %v522 = vpop.xlane.xlu0 %521
        %523 = vadd.xlane.f32.xlu0 %v490
        %v524 = vpop.xlane.xlu0 %523
        %525 = vadd.xlane.f32.xlu0 %v491
        %v526 = vpop.xlane.xlu0 %525
        %527 = vadd.xlane.f32.xlu0 %v492
        %v528 = vpop.xlane.xlu0 %527
        %529 = vadd.xlane.f32.xlu0 %v493
        %v530 = vpop.xlane.xlu0 %529
        %531 = vadd.xlane.f32.xlu0 %v494
        %v532 = vpop.xlane.xlu0 %531
        %533 = vadd.xlane.f32.xlu0 %v495
        %v534 = vpop.xlane.xlu0 %533
        %535 = vadd.xlane.f32.xlu0 %v496
        %v536 = vpop.xlane.xlu0 %535
        %537 = vadd.xlane.f32.xlu0 %v497
        %v538 = vpop.xlane.xlu0 %537
        %539 = vadd.xlane.f32.xlu0 %v498
        %v540 = vpop.xlane.xlu0 %539
        %541 = vadd.xlane.f32.xlu0 %v499
        %v542 = vpop.xlane.xlu0 %541
        %543 = vadd.xlane.f32.xlu0 %v500
        %v544 = vpop.xlane.xlu0 %543
        %545 = vadd.xlane.f32.xlu0 %v501
        %v546 = vpop.xlane.xlu0 %545
        %547 = vadd.xlane.f32.xlu0 %v502
        %v548 = vpop.xlane.xlu0 %547
        %549 = vadd.xlane.f32.xlu0 %v503
        %v550 = vpop.xlane.xlu0 %549
        %551 = vadd.xlane.f32.xlu0 %v504
        %v552 = vpop.xlane.xlu0 %551
        %553 = vadd.xlane.f32.xlu0 %v505
        %v554 = vpop.xlane.xlu0 %553
        %555 = vadd.xlane.f32.xlu0 %v506
        %v556 = vpop.xlane.xlu0 %555
        %557 = vadd.xlane.f32.xlu0 %v507
        %v558 = vpop.xlane.xlu0 %557
        %559 = vadd.xlane.f32.xlu0 %v508
        %v560 = vpop.xlane.xlu0 %559
        %561 = vadd.xlane.f32.xlu0 %v509
        %v562 = vpop.xlane.xlu0 %561
        %563 = vadd.xlane.f32.xlu0 %v510
        %v564 = vpop.xlane.xlu0 %563
        %565 = vadd.xlane.f32.xlu0 %v511
        %v566 = vpop.xlane.xlu0 %565
        %567 = vadd.xlane.f32.xlu0 %v512
        %v568 = vpop.xlane.xlu0 %567
        %569 = vadd.xlane.f32.xlu0 %v513
        %v570 = vpop.xlane.xlu0 %569
        %571 = vadd.xlane.f32.xlu0 %v514
        %v572 = vpop.xlane.xlu0 %571
        %573 = vadd.xlane.f32.xlu0 %v515
        %v574 = vpop.xlane.xlu0 %573
        %575 = vadd.xlane.f32.xlu0 %v516
        %v576 = vpop.xlane.xlu0 %575
        %577 = vadd.xlane.f32.xlu0 %v517
        %v578 = vpop.xlane.xlu0 %577
        %579 = vadd.xlane.f32.xlu0 %v518
        %v580 = vpop.xlane.xlu0 %579
        %581 = vadd.xlane.f32.xlu0 %v519
        %v582 = vpop.xlane.xlu0 %581
        %583 = vadd.xlane.f32.xlu0 %v520
        %v584 = vpop.xlane.xlu0 %583
        %v585 = vmul.f32 %v522, %v424
        %v586 = vmul.f32 %v524, %v424
        %v587 = vmul.f32 %v526, %v424
        %v588 = vmul.f32 %v528, %v424
        %v589 = vmul.f32 %v530, %v424
        %v590 = vmul.f32 %v532, %v424
        %v591 = vmul.f32 %v534, %v424
        %v592 = vmul.f32 %v536, %v424
        %v593 = vmul.f32 %v538, %v424
        %v594 = vmul.f32 %v540, %v424
        %v595 = vmul.f32 %v542, %v424
        %v596 = vmul.f32 %v544, %v424
        %v597 = vmul.f32 %v546, %v424
        %v598 = vmul.f32 %v548, %v424
        %v599 = vmul.f32 %v550, %v424
        %v600 = vmul.f32 %v552, %v424
        %v601 = vmul.f32 %v554, %v424
        %v602 = vmul.f32 %v556, %v424
        %v603 = vmul.f32 %v558, %v424
        %v604 = vmul.f32 %v560, %v424
        %v605 = vmul.f32 %v562, %v424
        %v606 = vmul.f32 %v564, %v424
        %v607 = vmul.f32 %v566, %v424
        %v608 = vmul.f32 %v568, %v424
        %v609 = vmul.f32 %v570, %v424
        %v610 = vmul.f32 %v572, %v424
        %v611 = vmul.f32 %v574, %v424
        %v612 = vmul.f32 %v576, %v424
        %v613 = vmul.f32 %v578, %v424
        %v614 = vmul.f32 %v580, %v424
        %v615 = vmul.f32 %v582, %v424
        %v616 = vmul.f32 %v584, %v424
        %v617 = vadd.f32 %v585, 1e-05
        %v618 = vadd.f32 %v586, 1e-05
        %v619 = vadd.f32 %v587, 1e-05
        %v620 = vadd.f32 %v588, 1e-05
        %v621 = vadd.f32 %v589, 1e-05
        %v622 = vadd.f32 %v590, 1e-05
        %v623 = vadd.f32 %v591, 1e-05
        %v624 = vadd.f32 %v592, 1e-05
        %v625 = vadd.f32 %v593, 1e-05
        %v626 = vadd.f32 %v594, 1e-05
        %v627 = vadd.f32 %v595, 1e-05
        %v628 = vadd.f32 %v596, 1e-05
        %v629 = vadd.f32 %v597, 1e-05
        %v630 = vadd.f32 %v598, 1e-05
        %v631 = vadd.f32 %v599, 1e-05
        %v632 = vadd.f32 %v600, 1e-05
        %v633 = vadd.f32 %v601, 1e-05
        %v634 = vadd.f32 %v602, 1e-05
        %v635 = vadd.f32 %v603, 1e-05
        %v636 = vadd.f32 %v604, 1e-05
        %v637 = vadd.f32 %v605, 1e-05
        %v638 = vadd.f32 %v606, 1e-05
        %v639 = vadd.f32 %v607, 1e-05
        %v640 = vadd.f32 %v608, 1e-05
        %v641 = vadd.f32 %v609, 1e-05
        %v642 = vadd.f32 %v610, 1e-05
        %v643 = vadd.f32 %v611, 1e-05
        %v644 = vadd.f32 %v612, 1e-05
        %v645 = vadd.f32 %v613, 1e-05
        %v646 = vadd.f32 %v614, 1e-05
        %v647 = vadd.f32 %v615, 1e-05
        %v648 = vadd.f32 %v616, 1e-05
        %v649 = vrsqrt.pop %v617
        %v650 = vrsqrt.pop %v618
        %v651 = vrsqrt.pop %v619
        %v652 = vrsqrt.pop %v620
        %v653 = vrsqrt.pop %v621
        %v654 = vrsqrt.pop %v622
        %v655 = vrsqrt.pop %v623
        %v656 = vrsqrt.pop %v624
        %v657 = vrsqrt.pop %v625
        %v658 = vrsqrt.pop %v626
        %v659 = vrsqrt.pop %v627
        %v660 = vrsqrt.pop %v628
        %v661 = vrsqrt.pop %v629
        %v662 = vrsqrt.pop %v630
        %v663 = vrsqrt.pop %v631
        %v664 = vrsqrt.pop %v632
        %v665 = vrsqrt.pop %v633
        %v666 = vrsqrt.pop %v634
        %v667 = vrsqrt.pop %v635
        %v668 = vrsqrt.pop %v636
        %v669 = vrsqrt.pop %v637
        %v670 = vrsqrt.pop %v638
        %v671 = vrsqrt.pop %v639
        %v672 = vrsqrt.pop %v640
        %v673 = vrsqrt.pop %v641
        %v674 = vrsqrt.pop %v642
        %v675 = vrsqrt.pop %v643
        %v676 = vrsqrt.pop %v644
        %v677 = vrsqrt.pop %v645
        %v678 = vrsqrt.pop %v646
        %v679 = vrsqrt.pop %v647
        %v680 = vrsqrt.pop %v648
        %v681 = vmul.f32 %v457, %v649
        %v682 = vmul.f32 %v458, %v650
        %v683 = vmul.f32 %v459, %v651
        %v684 = vmul.f32 %v460, %v652
        %v685 = vmul.f32 %v461, %v653
        %v686 = vmul.f32 %v462, %v654
        %v687 = vmul.f32 %v463, %v655
        %v688 = vmul.f32 %v464, %v656
        %v689 = vmul.f32 %v465, %v657
        %v690 = vmul.f32 %v466, %v658
        %v691 = vmul.f32 %v467, %v659
        %v692 = vmul.f32 %v468, %v660
        %v693 = vmul.f32 %v469, %v661
        %v694 = vmul.f32 %v470, %v662
        %v695 = vmul.f32 %v471, %v663
        %v696 = vmul.f32 %v472, %v664
        %v697 = vmul.f32 %v473, %v665
        %v698 = vmul.f32 %v474, %v666
        %v699 = vmul.f32 %v475, %v667
        %v700 = vmul.f32 %v476, %v668
        %v701 = vmul.f32 %v477, %v669
        %v702 = vmul.f32 %v478, %v670
        %v703 = vmul.f32 %v479, %v671
        %v704 = vmul.f32 %v480, %v672
        %v705 = vmul.f32 %v481, %v673
        %v706 = vmul.f32 %v482, %v674
        %v707 = vmul.f32 %v483, %v675
        %v708 = vmul.f32 %v484, %v676
        %v709 = vmul.f32 %v485, %v677
        %v710 = vmul.f32 %v486, %v678
        %v711 = vmul.f32 %v487, %v679
        %v712 = vmul.f32 %v488, %v680
        %v713 = vld [vmem:[%s1] sm:$0x1]
        %v715 = vlaneseq
        %v716 = vshrl.u32 %v715, 7
        %v717 = vsub.s32 0, %v716
        %v718 = vrot.slane %v713, %v717
        %v720 = vmul.f32 %v681, %v718
        %v721 = vmul.f32 %v682, %v718
        %v722 = vmul.f32 %v683, %v718
        %v723 = vmul.f32 %v684, %v718
        %v724 = vmul.f32 %v685, %v718
        %v725 = vmul.f32 %v686, %v718
        %v726 = vmul.f32 %v687, %v718
        %v727 = vmul.f32 %v688, %v718
        %v728 = vmul.f32 %v689, %v718
        %v729 = vmul.f32 %v690, %v718
        %v730 = vmul.f32 %v691, %v718
        %v731 = vmul.f32 %v692, %v718
        %v732 = vmul.f32 %v693, %v718
        %v733 = vmul.f32 %v694, %v718
        %v734 = vmul.f32 %v695, %v718
        %v735 = vmul.f32 %v696, %v718
        %v736 = vmul.f32 %v697, %v718
        %v737 = vmul.f32 %v698, %v718
        %v738 = vmul.f32 %v699, %v718
        %v739 = vmul.f32 %v700, %v718
        %v740 = vmul.f32 %v701, %v718
        %v741 = vmul.f32 %v702, %v718
        %v742 = vmul.f32 %v703, %v718
        %v743 = vmul.f32 %v704, %v718
        %v744 = vmul.f32 %v705, %v718
        %v745 = vmul.f32 %v706, %v718
        %v746 = vmul.f32 %v707, %v718
        %v747 = vmul.f32 %v708, %v718
        %v748 = vmul.f32 %v709, %v718
        %v749 = vmul.f32 %v710, %v718
        %v750 = vmul.f32 %v711, %v718
        %v751 = vmul.f32 %v712, %v718
        %v752 = vld [vmem:[%s2] sm:$0x1]
        %v754 = vlaneseq
        %v755 = vshrl.u32 %v754, 7
        %v756 = vsub.s32 0, %v755
        %v757 = vrot.slane %v752, %v756
        %v759 = vadd.f32 %v720, %v757
        %v760 = vadd.f32 %v721, %v757
        %v761 = vadd.f32 %v722, %v757
        %v762 = vadd.f32 %v723, %v757
        %v763 = vadd.f32 %v724, %v757
        %v764 = vadd.f32 %v725, %v757
        %v765 = vadd.f32 %v726, %v757
        %v766 = vadd.f32 %v727, %v757
        %v767 = vadd.f32 %v728, %v757
        %v768 = vadd.f32 %v729, %v757
        %v769 = vadd.f32 %v730, %v757
        %v770 = vadd.f32 %v731, %v757
        %v771 = vadd.f32 %v732, %v757
        %v772 = vadd.f32 %v733, %v757
        %v773 = vadd.f32 %v734, %v757
        %v774 = vadd.f32 %v735, %v757
        %v775 = vadd.f32 %v736, %v757
        %v776 = vadd.f32 %v737, %v757
        %v777 = vadd.f32 %v738, %v757
        %v778 = vadd.f32 %v739, %v757
        %v779 = vadd.f32 %v740, %v757
        %v780 = vadd.f32 %v741, %v757
        %v781 = vadd.f32 %v742, %v757
        %v782 = vadd.f32 %v743, %v757
        %v783 = vadd.f32 %v744, %v757
        %v784 = vadd.f32 %v745, %v757
        %v785 = vadd.f32 %v746, %v757
        %v786 = vadd.f32 %v747, %v757
        %v787 = vadd.f32 %v748, %v757
        %v788 = vadd.f32 %v749, %v757
        %v789 = vadd.f32 %v750, %v757
        %v790 = vadd.f32 %v751, %v757
        %v791 = vld [vmem:[#allocation5] sm:$0xff]
        %v792 = vld [vmem:[#allocation5 + $0x8] sm:$0xff]
        %v793 = vld [vmem:[#allocation5 + $0x10] sm:$0xff]
        %v794 = vld [vmem:[#allocation5 + $0x18] sm:$0xff]
        %v795 = vld [vmem:[#allocation5 + $0x20] sm:$0xff]
        %v796 = vld [vmem:[#allocation5 + $0x28] sm:$0xff]
        %v797 = vld [vmem:[#allocation5 + $0x30] sm:$0xff]
        %v798 = vld [vmem:[#allocation5 + $0x38] sm:$0xff]
        %v799 = vld [vmem:[#allocation5 + $0x40] sm:$0xff]
        %v800 = vld [vmem:[#allocation5 + $0x48] sm:$0xff]
        %v801 = vld [vmem:[#allocation5 + $0x50] sm:$0xff]
        %v802 = vld [vmem:[#allocation5 + $0x58] sm:$0xff]
        %v803 = vld [vmem:[#allocation5 + $0x60] sm:$0xff]
        %v804 = vld [vmem:[#allocation5 + $0x68] sm:$0xff]
        %v805 = vld [vmem:[#allocation5 + $0x70] sm:$0xff]
        %v806 = vld [vmem:[#allocation5 + $0x78] sm:$0xff]
        %v807 = vld [vmem:[#allocation5 + $0x80] sm:$0xff]
        %v808 = vld [vmem:[#allocation5 + $0x88] sm:$0xff]
        %v809 = vld [vmem:[#allocation5 + $0x90] sm:$0xff]
        %v810 = vld [vmem:[#allocation5 + $0x98] sm:$0xff]
        %v811 = vld [vmem:[#allocation5 + $0xa0] sm:$0xff]
        %v812 = vld [vmem:[#allocation5 + $0xa8] sm:$0xff]
        %v813 = vld [vmem:[#allocation5 + $0xb0] sm:$0xff]
        %v814 = vld [vmem:[#allocation5 + $0xb8] sm:$0xff]
        %v815 = vld [vmem:[#allocation5 + $0xc0] sm:$0xff]
        %v816 = vld [vmem:[#allocation5 + $0xc8] sm:$0xff]
        %v817 = vld [vmem:[#allocation5 + $0xd0] sm:$0xff]
        %v818 = vld [vmem:[#allocation5 + $0xd8] sm:$0xff]
        %v819 = vld [vmem:[#allocation5 + $0xe0] sm:$0xff]
        %v820 = vld [vmem:[#allocation5 + $0xe8] sm:$0xff]
        %v821 = vld [vmem:[#allocation5 + $0xf0] sm:$0xff]
        %v822 = vld [vmem:[#allocation5 + $0xf8] sm:$0xff]
        %v823 = vld [vmem:[%s4] sm:$0x3]
        %v825 = vlaneseq
        %v826 = vshrl.u32 %v825, 7
        %v827 = vsub.s32 0, %v826
        %v828 = vrot.slane %v823, %v827
        %v829 = vlaneseq
        %v830 = vshrl.u32 %v829, 7
        %v831 = vsub.s32 1, %v830
        %v832 = vrot.slane %v823, %v831
        %835 = vmatprep.subr.mxu0 %v792
        %836 = vmatpush1.msra.mxu0 %v791
        %837 = vmatprep.subr.mxu0 %v794
        %838 = vmatpush1.msra.mxu0 %v793
        %839 = vmatprep.subr.mxu0 %v796
        %840 = vmatpush1.msra.mxu0 %v795
        %841 = vmatprep.subr.mxu0 %v798
        %842 = vmatpush1.msra.mxu0 %v797
        %843 = vmatprep.subr.mxu0 %v800
        %844 = vmatpush1.msra.mxu0 %v799
        %845 = vmatprep.subr.mxu0 %v802
        %846 = vmatpush1.msra.mxu0 %v801
        %847 = vmatprep.subr.mxu0 %v804
        %848 = vmatpush1.msra.mxu0 %v803
        %849 = vmatprep.subr.mxu0 %v806
        %850 = vmatpush1.msra.mxu0 %v805
        %851 = vmatprep.subr.mxu0 %v808
        %852 = vmatpush1.msra.mxu0 %v807
        %853 = vmatprep.subr.mxu0 %v810
        %854 = vmatpush1.msra.mxu0 %v809
        %855 = vmatprep.subr.mxu0 %v812
        %856 = vmatpush1.msra.mxu0 %v811
        %857 = vmatprep.subr.mxu0 %v814
        %858 = vmatpush1.msra.mxu0 %v813
        %859 = vmatprep.subr.mxu0 %v816
        %860 = vmatpush1.msra.mxu0 %v815
        %861 = vmatprep.subr.mxu0 %v818
        %862 = vmatpush1.msra.mxu0 %v817
        %863 = vmatprep.subr.mxu0 %v820
        %864 = vmatpush1.msra.mxu0 %v819
        %865 = vmatprep.subr.mxu0 %v822
        %866 = vmatpush1.msra.mxu0 %v821
        %867 = vmatprep.subr.mxu0 0.0
        %868 = vmatpush1.msra.mxu0 0.0
        %869 = vmatprep.subr.mxu0 0.0
        %870 = vmatpush1.msra.mxu0 0.0
        %871 = vmatprep.subr.mxu0 0.0
        %872 = vmatpush1.msra.mxu0 0.0
        %873 = vmatprep.subr.mxu0 0.0
        %874 = vmatpush1.msra.mxu0 0.0
        %875 = vmatprep.subr.mxu0 0.0
        %876 = vmatpush1.msra.mxu0 0.0
        %877 = vmatprep.subr.mxu0 0.0
        %878 = vmatpush1.msra.mxu0 0.0
        %879 = vmatprep.subr.mxu0 0.0
        %880 = vmatpush1.msra.mxu0 0.0
        %881 = vmatprep.subr.mxu0 0.0
        %882 = vmatpush1.msra.mxu0 0.0
        %883 = vmatprep.subr.mxu0 0.0
        %884 = vmatpush1.msra.mxu0 0.0
        %885 = vmatprep.subr.mxu0 0.0
        %886 = vmatpush1.msra.mxu0 0.0
        %887 = vmatprep.subr.mxu0 0.0
        %888 = vmatpush1.msra.mxu0 0.0
        %889 = vmatprep.subr.mxu0 0.0
        %890 = vmatpush1.msra.mxu0 0.0
        %891 = vmatprep.subr.mxu0 0.0
        %892 = vmatpush1.msra.mxu0 0.0
        %893 = vmatprep.subr.mxu0 0.0
        %894 = vmatpush1.msra.mxu0 0.0
        %895 = vmatprep.subr.mxu0 0.0
        %896 = vmatpush1.msra.mxu0 0.0
        %897 = vmatprep.subr.mxu0 0.0
        %898 = vmatpush1.msra.mxu0 0.0
        %899 = vmatprep.mubr.f32.mxu0 0.0
        %900 = vmatmul.mubr.f32.gmra.mrb[0].mxu0 %v759
        %v901 = vpop.f32.mrb[0].mxu0
        %v902 = vadd.f32 %v828, %v901
        %v903 = vpop.f32.mrb[0].mxu0
        %v904 = vadd.f32 %v832, %v903
        %905 = vmatprep.mubr.f32.mxu0 0.0
        %906 = vmatmul.mubr.f32.gmra.mrb[0].mxu0 %v760
        %v907 = vpop.f32.mrb[0].mxu0
        %v908 = vadd.f32 %v828, %v907
        %v909 = vpop.f32.mrb[0].mxu0
        %v910 = vadd.f32 %v832, %v909
        %911 = vmatprep.mubr.f32.mxu0 0.0
        %912 = vmatmul.mubr.f32.gmra.mrb[0].mxu0 %v761
        %v913 = vpop.f32.mrb[0].mxu0
        %v914 = vadd.f32 %v828, %v913
        %v915 = vpop.f32.mrb[0].mxu0
        %v916 = vadd.f32 %v832, %v915
        %917 = vmatprep.mubr.f32.mxu0 0.0
        %918 = vmatmul.mubr.f32.gmra.mrb[0].mxu0 %v762
        %v919 = vpop.f32.mrb[0].mxu0
        %v920 = vadd.f32 %v828, %v919
        %v921 = vpop.f32.mrb[0].mxu0
        %v922 = vadd.f32 %v832, %v921
        %923 = vmatprep.mubr.f32.mxu0 0.0
        %924 = vmatmul.mubr.f32.gmra.mrb[0].mxu0 %v763
        %v925 = vpop.f32.mrb[0].mxu0
        %v926 = vadd.f32 %v828, %v925
        %v927 = vpop.f32.mrb[0].mxu0
        %v928 = vadd.f32 %v832, %v927
        %929 = vmatprep.mubr.f32.mxu0 0.0
        %930 = vmatmul.mubr.f32.gmra.mrb[0].mxu0 %v764
        %v931 = vpop.f32.mrb[0].mxu0
        %v932 = vadd.f32 %v828, %v931
        %v933 = vpop.f32.mrb[0].mxu0
        %v934 = vadd.f32 %v832, %v933
        %935 = vmatprep.mubr.f32.mxu0 0.0
        %936 = vmatmul.mubr.f32.gmra.mrb[0].mxu0 %v765
        %v937 = vpop.f32.mrb[0].mxu0
        %v938 = vadd.f32 %v828, %v937
        %v939 = vpop.f32.mrb[0].mxu0
        %v940 = vadd.f32 %v832, %v939
        %941 = vmatprep.mubr.f32.mxu0 0.0
        %942 = vmatmul.mubr.f32.gmra.mrb[0].mxu0 %v766
        %v943 = vpop.f32.mrb[0].mxu0
        %v944 = vadd.f32 %v828, %v943
        %v945 = vpop.f32.mrb[0].mxu0
        %v946 = vadd.f32 %v832, %v945
        %947 = vmatprep.mubr.f32.mxu0 0.0
        %948 = vmatmul.mubr.f32.gmra.mrb[0].mxu0 %v767
        %v949 = vpop.f32.mrb[0].mxu0
        %v950 = vadd.f32 %v828, %v949
        %v951 = vpop.f32.mrb[0].mxu0
        %v952 = vadd.f32 %v832, %v951
        %953 = vmatprep.mubr.f32.mxu0 0.0
        %954 = vmatmul.mubr.f32.gmra.mrb[0].mxu0 %v768
        %v955 = vpop.f32.mrb[0].mxu0
        %v956 = vadd.f32 %v828, %v955
        %v957 = vpop.f32.mrb[0].mxu0
        %v958 = vadd.f32 %v832, %v957
        %959 = vmatprep.mubr.f32.mxu0 0.0
        %960 = vmatmul.mubr.f32.gmra.mrb[0].mxu0 %v769
        %v961 = vpop.f32.mrb[0].mxu0
        %v962 = vadd.f32 %v828, %v961
        %v963 = vpop.f32.mrb[0].mxu0
        %v964 = vadd.f32 %v832, %v963
        %965 = vmatprep.mubr.f32.mxu0 0.0
        %966 = vmatmul.mubr.f32.gmra.mrb[0].mxu0 %v770
        %v967 = vpop.f32.mrb[0].mxu0
        %v968 = vadd.f32 %v828, %v967
        %v969 = vpop.f32.mrb[0].mxu0
        %v970 = vadd.f32 %v832, %v969
        %971 = vmatprep.mubr.f32.mxu0 0.0
        %972 = vmatmul.mubr.f32.gmra.mrb[0].mxu0 %v771
        %v973 = vpop.f32.mrb[0].mxu0
        %v974 = vadd.f32 %v828, %v973
        %v975 = vpop.f32.mrb[0].mxu0
        %v976 = vadd.f32 %v832, %v975
        %977 = vmatprep.mubr.f32.mxu0 0.0
        %978 = vmatmul.mubr.f32.gmra.mrb[0].mxu0 %v772
        %v979 = vpop.f32.mrb[0].mxu0
        %v980 = vadd.f32 %v828, %v979
        %v981 = vpop.f32.mrb[0].mxu0
        %v982 = vadd.f32 %v832, %v981
        %983 = vmatprep.mubr.f32.mxu0 0.0
        %984 = vmatmul.mubr.f32.gmra.mrb[0].mxu0 %v773
        %v985 = vpop.f32.mrb[0].mxu0
        %v986 = vadd.f32 %v828, %v985
        %v987 = vpop.f32.mrb[0].mxu0
        %v988 = vadd.f32 %v832, %v987
        %989 = vmatprep.mubr.f32.mxu0 0.0
        %990 = vmatmul.mubr.f32.gmra.mrb[0].mxu0 %v774
        %v991 = vpop.f32.mrb[0].mxu0
        %v992 = vadd.f32 %v828, %v991
        %v993 = vpop.f32.mrb[0].mxu0
        %v994 = vadd.f32 %v832, %v993
        %995 = vmatprep.mubr.f32.mxu0 0.0
        %996 = vmatmul.mubr.f32.gmra.mrb[0].mxu0 %v775
        %v997 = vpop.f32.mrb[0].mxu0
        %v998 = vadd.f32 %v828, %v997
        %v999 = vpop.f32.mrb[0].mxu0
        %v1000 = vadd.f32 %v832, %v999
        %1001 = vmatprep.mubr.f32.mxu0 0.0
        %1002 = vmatmul.mubr.f32.gmra.mrb[0].mxu0 %v776
        %v1003 = vpop.f32.mrb[0].mxu0
        %v1004 = vadd.f32 %v828, %v1003
        %v1005 = vpop.f32.mrb[0].mxu0
        %v1006 = vadd.f32 %v832, %v1005
        %1007 = vmatprep.mubr.f32.mxu0 0.0
        %1008 = vmatmul.mubr.f32.gmra.mrb[0].mxu0 %v777
        %v1009 = vpop.f32.mrb[0].mxu0
        %v1010 = vadd.f32 %v828, %v1009
        %v1011 = vpop.f32.mrb[0].mxu0
        %v1012 = vadd.f32 %v832, %v1011
        %1013 = vmatprep.mubr.f32.mxu0 0.0
        %1014 = vmatmul.mubr.f32.gmra.mrb[0].mxu0 %v778
        %v1015 = vpop.f32.mrb[0].mxu0
        %v1016 = vadd.f32 %v828, %v1015
        %v1017 = vpop.f32.mrb[0].mxu0
        %v1018 = vadd.f32 %v832, %v1017
        %1019 = vmatprep.mubr.f32.mxu0 0.0
        %1020 = vmatmul.mubr.f32.gmra.mrb[0].mxu0 %v779
        %v1021 = vpop.f32.mrb[0].mxu0
        %v1022 = vadd.f32 %v828, %v1021
        %v1023 = vpop.f32.mrb[0].mxu0
        %v1024 = vadd.f32 %v832, %v1023
        %1025 = vmatprep.mubr.f32.mxu0 0.0
        %1026 = vmatmul.mubr.f32.gmra.mrb[0].mxu0 %v780
        %v1027 = vpop.f32.mrb[0].mxu0
        %v1028 = vadd.f32 %v828, %v1027
        %v1029 = vpop.f32.mrb[0].mxu0
        %v1030 = vadd.f32 %v832, %v1029
        %1031 = vmatprep.mubr.f32.mxu0 0.0
        %1032 = vmatmul.mubr.f32.gmra.mrb[0].mxu0 %v781
        %v1033 = vpop.f32.mrb[0].mxu0
        %v1034 = vadd.f32 %v828, %v1033
        %v1035 = vpop.f32.mrb[0].mxu0
        %v1036 = vadd.f32 %v832, %v1035
        %1037 = vmatprep.mubr.f32.mxu0 0.0
        %1038 = vmatmul.mubr.f32.gmra.mrb[0].mxu0 %v782
        %v1039 = vpop.f32.mrb[0].mxu0
        %v1040 = vadd.f32 %v828, %v1039
        %v1041 = vpop.f32.mrb[0].mxu0
        %v1042 = vadd.f32 %v832, %v1041
        %1043 = vmatprep.mubr.f32.mxu0 0.0
        %1044 = vmatmul.mubr.f32.gmra.mrb[0].mxu0 %v783
        %v1045 = vpop.f32.mrb[0].mxu0
        %v1046 = vadd.f32 %v828, %v1045
        %v1047 = vpop.f32.mrb[0].mxu0
        %v1048 = vadd.f32 %v832, %v1047
        %1049 = vmatprep.mubr.f32.mxu0 0.0
        %1050 = vmatmul.mubr.f32.gmra.mrb[0].mxu0 %v784
        %v1051 = vpop.f32.mrb[0].mxu0
        %v1052 = vadd.f32 %v828, %v1051
        %v1053 = vpop.f32.mrb[0].mxu0
        %v1054 = vadd.f32 %v832, %v1053
        %1055 = vmatprep.mubr.f32.mxu0 0.0
        %1056 = vmatmul.mubr.f32.gmra.mrb[0].mxu0 %v785
        %v1057 = vpop.f32.mrb[0].mxu0
        %v1058 = vadd.f32 %v828, %v1057
        %v1059 = vpop.f32.mrb[0].mxu0
        %v1060 = vadd.f32 %v832, %v1059
        %1061 = vmatprep.mubr.f32.mxu0 0.0
        %1062 = vmatmul.mubr.f32.gmra.mrb[0].mxu0 %v786
        %v1063 = vpop.f32.mrb[0].mxu0
        %v1064 = vadd.f32 %v828, %v1063
        %v1065 = vpop.f32.mrb[0].mxu0
        %v1066 = vadd.f32 %v832, %v1065
        %1067 = vmatprep.mubr.f32.mxu0 0.0
        %1068 = vmatmul.mubr.f32.gmra.mrb[0].mxu0 %v787
        %v1069 = vpop.f32.mrb[0].mxu0
        %v1070 = vadd.f32 %v828, %v1069
        %v1071 = vpop.f32.mrb[0].mxu0
        %v1072 = vadd.f32 %v832, %v1071
        %1073 = vmatprep.mubr.f32.mxu0 0.0
        %1074 = vmatmul.mubr.f32.gmra.mrb[0].mxu0 %v788
        %v1075 = vpop.f32.mrb[0].mxu0
        %v1076 = vadd.f32 %v828, %v1075
        %v1077 = vpop.f32.mrb[0].mxu0
        %v1078 = vadd.f32 %v832, %v1077
        %1079 = vmatprep.mubr.f32.mxu0 0.0
        %1080 = vmatmul.mubr.f32.gmra.mrb[0].mxu0 %v789
        %v1081 = vpop.f32.mrb[0].mxu0
        %v1082 = vadd.f32 %v828, %v1081
        %v1083 = vpop.f32.mrb[0].mxu0
        %v1084 = vadd.f32 %v832, %v1083
        %1085 = vmatprep.mubr.f32.mxu0 0.0
        %1086 = vmatmul.mubr.f32.gmra.mrb[0].mxu0 %v790
        %v1087 = vpop.f32.mrb[0].mxu0
        %v1088 = vadd.f32 %v828, %v1087
        %v1089 = vpop.f32.mrb[0].mxu0
        %v1090 = vadd.f32 %v832, %v1089
        %1091 = vdwg.mxu0
        %v1092 = vmul.f32 %v902, 0.5
        %v1093 = vmul.f32 %v904, 0.5
        %v1094 = vmul.f32 %v908, 0.5
        %v1095 = vmul.f32 %v910, 0.5
        %v1096 = vmul.f32 %v914, 0.5
        %v1097 = vmul.f32 %v916, 0.5
        %v1098 = vmul.f32 %v920, 0.5
        %v1099 = vmul.f32 %v922, 0.5
        %v1100 = vmul.f32 %v926, 0.5
        %v1101 = vmul.f32 %v928, 0.5
        %v1102 = vmul.f32 %v932, 0.5
        %v1103 = vmul.f32 %v934, 0.5
        %v1104 = vmul.f32 %v938, 0.5
        %v1105 = vmul.f32 %v940, 0.5
        %v1106 = vmul.f32 %v944, 0.5
        %v1107 = vmul.f32 %v946, 0.5
        %v1108 = vmul.f32 %v950, 0.5
        %v1109 = vmul.f32 %v952, 0.5
        %v1110 = vmul.f32 %v956, 0.5
        %v1111 = vmul.f32 %v958, 0.5
        %v1112 = vmul.f32 %v962, 0.5
        %v1113 = vmul.f32 %v964, 0.5
        %v1114 = vmul.f32 %v968, 0.5
        %v1115 = vmul.f32 %v970, 0.5
        %v1116 = vmul.f32 %v974, 0.5
        %v1117 = vmul.f32 %v976, 0.5
        %v1118 = vmul.f32 %v980, 0.5
        %v1119 = vmul.f32 %v982, 0.5
        %v1120 = vmul.f32 %v986, 0.5
        %v1121 = vmul.f32 %v988, 0.5
        %v1122 = vmul.f32 %v992, 0.5
        %v1123 = vmul.f32 %v994, 0.5
        %v1124 = vmul.f32 %v998, 0.5
        %v1125 = vmul.f32 %v1000, 0.5
        %v1126 = vmul.f32 %v1004, 0.5
        %v1127 = vmul.f32 %v1006, 0.5
        %v1128 = vmul.f32 %v1010, 0.5
        %v1129 = vmul.f32 %v1012, 0.5
        %v1130 = vmul.f32 %v1016, 0.5
        %v1131 = vmul.f32 %v1018, 0.5
        %v1132 = vmul.f32 %v1022, 0.5
        %v1133 = vmul.f32 %v1024, 0.5
        %v1134 = vmul.f32 %v1028, 0.5
        %v1135 = vmul.f32 %v1030, 0.5
        %v1136 = vmul.f32 %v1034, 0.5
        %v1137 = vmul.f32 %v1036, 0.5
        %v1138 = vmul.f32 %v1040, 0.5
        %v1139 = vmul.f32 %v1042, 0.5
        %v1140 = vmul.f32 %v1046, 0.5
        %v1141 = vmul.f32 %v1048, 0.5
        %v1142 = vmul.f32 %v1052, 0.5
        %v1143 = vmul.f32 %v1054, 0.5
        %v1144 = vmul.f32 %v1058, 0.5
        %v1145 = vmul.f32 %v1060, 0.5
        %v1146 = vmul.f32 %v1064, 0.5
        %v1147 = vmul.f32 %v1066, 0.5
        %v1148 = vmul.f32 %v1070, 0.5
        %v1149 = vmul.f32 %v1072, 0.5
        %v1150 = vmul.f32 %v1076, 0.5
        %v1151 = vmul.f32 %v1078, 0.5
        %v1152 = vmul.f32 %v1082, 0.5
        %v1153 = vmul.f32 %v1084, 0.5
        %v1154 = vmul.f32 %v1088, 0.5
        %v1155 = vmul.f32 %v1090, 0.5
        %v1156 = vmul.f32 %v902, 0.044715
        %v1157 = vmul.f32 %v904, 0.044715
        %v1158 = vmul.f32 %v908, 0.044715
        %v1159 = vmul.f32 %v910, 0.044715
        %v1160 = vmul.f32 %v914, 0.044715
        %v1161 = vmul.f32 %v916, 0.044715
        %v1162 = vmul.f32 %v920, 0.044715
        %v1163 = vmul.f32 %v922, 0.044715
        %v1164 = vmul.f32 %v926, 0.044715
        %v1165 = vmul.f32 %v928, 0.044715
        %v1166 = vmul.f32 %v932, 0.044715
        %v1167 = vmul.f32 %v934, 0.044715
        %v1168 = vmul.f32 %v938, 0.044715
        %v1169 = vmul.f32 %v940, 0.044715
        %v1170 = vmul.f32 %v944, 0.044715
        %v1171 = vmul.f32 %v946, 0.044715
        %v1172 = vmul.f32 %v950, 0.044715
        %v1173 = vmul.f32 %v952, 0.044715
        %v1174 = vmul.f32 %v956, 0.044715
        %v1175 = vmul.f32 %v958, 0.044715
        %v1176 = vmul.f32 %v962, 0.044715
        %v1177 = vmul.f32 %v964, 0.044715
        %v1178 = vmul.f32 %v968, 0.044715
        %v1179 = vmul.f32 %v970, 0.044715
        %v1180 = vmul.f32 %v974, 0.044715
        %v1181 = vmul.f32 %v976, 0.044715
        %v1182 = vmul.f32 %v980, 0.044715
        %v1183 = vmul.f32 %v982, 0.044715
        %v1184 = vmul.f32 %v986, 0.044715
        %v1185 = vmul.f32 %v988, 0.044715
        %v1186 = vmul.f32 %v992, 0.044715
        %v1187 = vmul.f32 %v994, 0.044715
        %v1188 = vmul.f32 %v998, 0.044715
        %v1189 = vmul.f32 %v1000, 0.044715
        %v1190 = vmul.f32 %v1004, 0.044715
        %v1191 = vmul.f32 %v1006, 0.044715
        %v1192 = vmul.f32 %v1010, 0.044715
        %v1193 = vmul.f32 %v1012, 0.044715
        %v1194 = vmul.f32 %v1016, 0.044715
        %v1195 = vmul.f32 %v1018, 0.044715
        %v1196 = vmul.f32 %v1022, 0.044715
        %v1197 = vmul.f32 %v1024, 0.044715
        %v1198 = vmul.f32 %v1028, 0.044715
        %v1199 = vmul.f32 %v1030, 0.044715
        %v1200 = vmul.f32 %v1034, 0.044715
        %v1201 = vmul.f32 %v1036, 0.044715
        %v1202 = vmul.f32 %v1040, 0.044715
        %v1203 = vmul.f32 %v1042, 0.044715
        %v1204 = vmul.f32 %v1046, 0.044715
        %v1205 = vmul.f32 %v1048, 0.044715
        %v1206 = vmul.f32 %v1052, 0.044715
        %v1207 = vmul.f32 %v1054, 0.044715
        %v1208 = vmul.f32 %v1058, 0.044715
        %v1209 = vmul.f32 %v1060, 0.044715
        %v1210 = vmul.f32 %v1064, 0.044715
        %v1211 = vmul.f32 %v1066, 0.044715
        %v1212 = vmul.f32 %v1070, 0.044715
        %v1213 = vmul.f32 %v1072, 0.044715
        %v1214 = vmul.f32 %v1076, 0.044715
        %v1215 = vmul.f32 %v1078, 0.044715
        %v1216 = vmul.f32 %v1082, 0.044715
        %v1217 = vmul.f32 %v1084, 0.044715
        %v1218 = vmul.f32 %v1088, 0.044715
        %v1219 = vmul.f32 %v1090, 0.044715
        %v1220 = vmul.f32 %v1156, %v902
        %v1221 = vmul.f32 %v1157, %v904
        %v1222 = vmul.f32 %v1158, %v908
        %v1223 = vmul.f32 %v1159, %v910
        %v1224 = vmul.f32 %v1160, %v914
        %v1225 = vmul.f32 %v1161, %v916
        %v1226 = vmul.f32 %v1162, %v920
        %v1227 = vmul.f32 %v1163, %v922
        %v1228 = vmul.f32 %v1164, %v926
        %v1229 = vmul.f32 %v1165, %v928
        %v1230 = vmul.f32 %v1166, %v932
        %v1231 = vmul.f32 %v1167, %v934
        %v1232 = vmul.f32 %v1168, %v938
        %v1233 = vmul.f32 %v1169, %v940
        %v1234 = vmul.f32 %v1170, %v944
        %v1235 = vmul.f32 %v1171, %v946
        %v1236 = vmul.f32 %v1172, %v950
        %v1237 = vmul.f32 %v1173, %v952
        %v1238 = vmul.f32 %v1174, %v956
        %v1239 = vmul.f32 %v1175, %v958
        %v1240 = vmul.f32 %v1176, %v962
        %v1241 = vmul.f32 %v1177, %v964
        %v1242 = vmul.f32 %v1178, %v968
        %v1243 = vmul.f32 %v1179, %v970
        %v1244 = vmul.f32 %v1180, %v974
        %v1245 = vmul.f32 %v1181, %v976
        %v1246 = vmul.f32 %v1182, %v980
        %v1247 = vmul.f32 %v1183, %v982
        %v1248 = vmul.f32 %v1184, %v986
        %v1249 = vmul.f32 %v1185, %v988
        %v1250 = vmul.f32 %v1186, %v992
        %v1251 = vmul.f32 %v1187, %v994
        %v1252 = vmul.f32 %v1188, %v998
        %v1253 = vmul.f32 %v1189, %v1000
        %v1254 = vmul.f32 %v1190, %v1004
        %v1255 = vmul.f32 %v1191, %v1006
        %v1256 = vmul.f32 %v1192, %v1010
        %v1257 = vmul.f32 %v1193, %v1012
        %v1258 = vmul.f32 %v1194, %v1016
        %v1259 = vmul.f32 %v1195, %v1018
        %v1260 = vmul.f32 %v1196, %v1022
        %v1261 = vmul.f32 %v1197, %v1024
        %v1262 = vmul.f32 %v1198, %v1028
        %v1263 = vmul.f32 %v1199, %v1030
        %v1264 = vmul.f32 %v1200, %v1034
        %v1265 = vmul.f32 %v1201, %v1036
        %v1266 = vmul.f32 %v1202, %v1040
        %v1267 = vmul.f32 %v1203, %v1042
        %v1268 = vmul.f32 %v1204, %v1046
        %v1269 = vmul.f32 %v1205, %v1048
        %v1270 = vmul.f32 %v1206, %v1052
        %v1271 = vmul.f32 %v1207, %v1054
        %v1272 = vmul.f32 %v1208, %v1058
        %v1273 = vmul.f32 %v1209, %v1060
        %v1274 = vmul.f32 %v1210, %v1064
        %v1275 = vmul.f32 %v1211, %v1066
        %v1276 = vmul.f32 %v1212, %v1070
        %v1277 = vmul.f32 %v1213, %v1072
        %v1278 = vmul.f32 %v1214, %v1076
        %v1279 = vmul.f32 %v1215, %v1078
        %v1280 = vmul.f32 %v1216, %v1082
        %v1281 = vmul.f32 %v1217, %v1084
        %v1282 = vmul.f32 %v1218, %v1088
        %v1283 = vmul.f32 %v1219, %v1090
        %v1284 = vmul.f32 %v1220, %v902
        %v1285 = vmul.f32 %v1221, %v904
        %v1286 = vmul.f32 %v1222, %v908
        %v1287 = vmul.f32 %v1223, %v910
        %v1288 = vmul.f32 %v1224, %v914
        %v1289 = vmul.f32 %v1225, %v916
        %v1290 = vmul.f32 %v1226, %v920
        %v1291 = vmul.f32 %v1227, %v922
        %v1292 = vmul.f32 %v1228, %v926
        %v1293 = vmul.f32 %v1229, %v928
        %v1294 = vmul.f32 %v1230, %v932
        %v1295 = vmul.f32 %v1231, %v934
        %v1296 = vmul.f32 %v1232, %v938
        %v1297 = vmul.f32 %v1233, %v940
        %v1298 = vmul.f32 %v1234, %v944
        %v1299 = vmul.f32 %v1235, %v946
        %v1300 = vmul.f32 %v1236, %v950
        %v1301 = vmul.f32 %v1237, %v952
        %v1302 = vmul.f32 %v1238, %v956
        %v1303 = vmul.f32 %v1239, %v958
        %v1304 = vmul.f32 %v1240, %v962
        %v1305 = vmul.f32 %v1241, %v964
        %v1306 = vmul.f32 %v1242, %v968
        %v1307 = vmul.f32 %v1243, %v970
        %v1308 = vmul.f32 %v1244, %v974
        %v1309 = vmul.f32 %v1245, %v976
        %v1310 = vmul.f32 %v1246, %v980
        %v1311 = vmul.f32 %v1247, %v982
        %v1312 = vmul.f32 %v1248, %v986
        %v1313 = vmul.f32 %v1249, %v988
        %v1314 = vmul.f32 %v1250, %v992
        %v1315 = vmul.f32 %v1251, %v994
        %v1316 = vmul.f32 %v1252, %v998
        %v1317 = vmul.f32 %v1253, %v1000
        %v1318 = vmul.f32 %v1254, %v1004
        %v1319 = vmul.f32 %v1255, %v1006
        %v1320 = vmul.f32 %v1256, %v1010
        %v1321 = vmul.f32 %v1257, %v1012
        %v1322 = vmul.f32 %v1258, %v1016
        %v1323 = vmul.f32 %v1259, %v1018
        %v1324 = vmul.f32 %v1260, %v1022
        %v1325 = vmul.f32 %v1261, %v1024
        %v1326 = vmul.f32 %v1262, %v1028
        %v1327 = vmul.f32 %v1263, %v1030
        %v1328 = vmul.f32 %v1264, %v1034
        %v1329 = vmul.f32 %v1265, %v1036
        %v1330 = vmul.f32 %v1266, %v1040
        %v1331 = vmul.f32 %v1267, %v1042
        %v1332 = vmul.f32 %v1268, %v1046
        %v1333 = vmul.f32 %v1269, %v1048
        %v1334 = vmul.f32 %v1270, %v1052
        %v1335 = vmul.f32 %v1271, %v1054
        %v1336 = vmul.f32 %v1272, %v1058
        %v1337 = vmul.f32 %v1273, %v1060
        %v1338 = vmul.f32 %v1274, %v1064
        %v1339 = vmul.f32 %v1275, %v1066
        %v1340 = vmul.f32 %v1276, %v1070
        %v1341 = vmul.f32 %v1277, %v1072
        %v1342 = vmul.f32 %v1278, %v1076
        %v1343 = vmul.f32 %v1279, %v1078
        %v1344 = vmul.f32 %v1280, %v1082
        %v1345 = vmul.f32 %v1281, %v1084
        %v1346 = vmul.f32 %v1282, %v1088
        %v1347 = vmul.f32 %v1283, %v1090
        %v1348 = vadd.f32 %v902, %v1284
        %v1349 = vadd.f32 %v904, %v1285
        %v1350 = vadd.f32 %v908, %v1286
        %v1351 = vadd.f32 %v910, %v1287
        %v1352 = vadd.f32 %v914, %v1288
        %v1353 = vadd.f32 %v916, %v1289
        %v1354 = vadd.f32 %v920, %v1290
        %v1355 = vadd.f32 %v922, %v1291
        %v1356 = vadd.f32 %v926, %v1292
        %v1357 = vadd.f32 %v928, %v1293
        %v1358 = vadd.f32 %v932, %v1294
        %v1359 = vadd.f32 %v934, %v1295
        %v1360 = vadd.f32 %v938, %v1296
        %v1361 = vadd.f32 %v940, %v1297
        %v1362 = vadd.f32 %v944, %v1298
        %v1363 = vadd.f32 %v946, %v1299
        %v1364 = vadd.f32 %v950, %v1300
        %v1365 = vadd.f32 %v952, %v1301
        %v1366 = vadd.f32 %v956, %v1302
        %v1367 = vadd.f32 %v958, %v1303
        %v1368 = vadd.f32 %v962, %v1304
        %v1369 = vadd.f32 %v964, %v1305
        %v1370 = vadd.f32 %v968, %v1306
        %v1371 = vadd.f32 %v970, %v1307
        %v1372 = vadd.f32 %v974, %v1308
        %v1373 = vadd.f32 %v976, %v1309
        %v1374 = vadd.f32 %v980, %v1310
        %v1375 = vadd.f32 %v982, %v1311
        %v1376 = vadd.f32 %v986, %v1312
        %v1377 = vadd.f32 %v988, %v1313
        %v1378 = vadd.f32 %v992, %v1314
        %v1379 = vadd.f32 %v994, %v1315
        %v1380 = vadd.f32 %v998, %v1316
        %v1381 = vadd.f32 %v1000, %v1317
        %v1382 = vadd.f32 %v1004, %v1318
        %v1383 = vadd.f32 %v1006, %v1319
        %v1384 = vadd.f32 %v1010, %v1320
        %v1385 = vadd.f32 %v1012, %v1321
        %v1386 = vadd.f32 %v1016, %v1322
        %v1387 = vadd.f32 %v1018, %v1323
        %v1388 = vadd.f32 %v1022, %v1324
        %v1389 = vadd.f32 %v1024, %v1325
        %v1390 = vadd.f32 %v1028, %v1326
        %v1391 = vadd.f32 %v1030, %v1327
        %v1392 = vadd.f32 %v1034, %v1328
        %v1393 = vadd.f32 %v1036, %v1329
        %v1394 = vadd.f32 %v1040, %v1330
        %v1395 = vadd.f32 %v1042, %v1331
        %v1396 = vadd.f32 %v1046, %v1332
        %v1397 = vadd.f32 %v1048, %v1333
        %v1398 = vadd.f32 %v1052, %v1334
        %v1399 = vadd.f32 %v1054, %v1335
        %v1400 = vadd.f32 %v1058, %v1336
        %v1401 = vadd.f32 %v1060, %v1337
        %v1402 = vadd.f32 %v1064, %v1338
        %v1403 = vadd.f32 %v1066, %v1339
        %v1404 = vadd.f32 %v1070, %v1340
        %v1405 = vadd.f32 %v1072, %v1341
        %v1406 = vadd.f32 %v1076, %v1342
        %v1407 = vadd.f32 %v1078, %v1343
        %v1408 = vadd.f32 %v1082, %v1344
        %v1409 = vadd.f32 %v1084, %v1345
        %v1410 = vadd.f32 %v1088, %v1346
        %v1411 = vadd.f32 %v1090, %v1347
        %v1412 = vmul.f32 %v1348, 0.7978846
        %v1413 = vmul.f32 %v1349, 0.7978846
        %v1414 = vmul.f32 %v1350, 0.7978846
        %v1415 = vmul.f32 %v1351, 0.7978846
        %v1416 = vmul.f32 %v1352, 0.7978846
        %v1417 = vmul.f32 %v1353, 0.7978846
        %v1418 = vmul.f32 %v1354, 0.7978846
        %v1419 = vmul.f32 %v1355, 0.7978846
        %v1420 = vmul.f32 %v1356, 0.7978846
        %v1421 = vmul.f32 %v1357, 0.7978846
        %v1422 = vmul.f32 %v1358, 0.7978846
        %v1423 = vmul.f32 %v1359, 0.7978846
        %v1424 = vmul.f32 %v1360, 0.7978846
        %v1425 = vmul.f32 %v1361, 0.7978846
        %v1426 = vmul.f32 %v1362, 0.7978846
        %v1427 = vmul.f32 %v1363, 0.7978846
        %v1428 = vmul.f32 %v1364, 0.7978846
        %v1429 = vmul.f32 %v1365, 0.7978846
        %v1430 = vmul.f32 %v1366, 0.7978846
        %v1431 = vmul.f32 %v1367, 0.7978846
        %v1432 = vmul.f32 %v1368, 0.7978846
        %v1433 = vmul.f32 %v1369, 0.7978846
        %v1434 = vmul.f32 %v1370, 0.7978846
        %v1435 = vmul.f32 %v1371, 0.7978846
        %v1436 = vmul.f32 %v1372, 0.7978846
        %v1437 = vmul.f32 %v1373, 0.7978846
        %v1438 = vmul.f32 %v1374, 0.7978846
        %v1439 = vmul.f32 %v1375, 0.7978846
        %v1440 = vmul.f32 %v1376, 0.7978846
        %v1441 = vmul.f32 %v1377, 0.7978846
        %v1442 = vmul.f32 %v1378, 0.7978846
        %v1443 = vmul.f32 %v1379, 0.7978846
        %v1444 = vmul.f32 %v1380, 0.7978846
        %v1445 = vmul.f32 %v1381, 0.7978846
        %v1446 = vmul.f32 %v1382, 0.7978846
        %v1447 = vmul.f32 %v1383, 0.7978846
        %v1448 = vmul.f32 %v1384, 0.7978846
        %v1449 = vmul.f32 %v1385, 0.7978846
        %v1450 = vmul.f32 %v1386, 0.7978846
        %v1451 = vmul.f32 %v1387, 0.7978846
        %v1452 = vmul.f32 %v1388, 0.7978846
        %v1453 = vmul.f32 %v1389, 0.7978846
        %v1454 = vmul.f32 %v1390, 0.7978846
        %v1455 = vmul.f32 %v1391, 0.7978846
        %v1456 = vmul.f32 %v1392, 0.7978846
        %v1457 = vmul.f32 %v1393, 0.7978846
        %v1458 = vmul.f32 %v1394, 0.7978846
        %v1459 = vmul.f32 %v1395, 0.7978846
        %v1460 = vmul.f32 %v1396, 0.7978846
        %v1461 = vmul.f32 %v1397, 0.7978846
        %v1462 = vmul.f32 %v1398, 0.7978846
        %v1463 = vmul.f32 %v1399, 0.7978846
        %v1464 = vmul.f32 %v1400, 0.7978846
        %v1465 = vmul.f32 %v1401, 0.7978846
        %v1466 = vmul.f32 %v1402, 0.7978846
        %v1467 = vmul.f32 %v1403, 0.7978846
        %v1468 = vmul.f32 %v1404, 0.7978846
        %v1469 = vmul.f32 %v1405, 0.7978846
        %v1470 = vmul.f32 %v1406, 0.7978846
        %v1471 = vmul.f32 %v1407, 0.7978846
        %v1472 = vmul.f32 %v1408, 0.7978846
        %v1473 = vmul.f32 %v1409, 0.7978846
        %v1474 = vmul.f32 %v1410, 0.7978846
        %v1475 = vmul.f32 %v1411, 0.7978846
        %v1476 = vtanh.pop %v1412
        %v1477 = vtanh.pop %v1413
        %v1478 = vtanh.pop %v1414
        %v1479 = vtanh.pop %v1415
        %v1480 = vtanh.pop %v1416
        %v1481 = vtanh.pop %v1417
        %v1482 = vtanh.pop %v1418
        %v1483 = vtanh.pop %v1419
        %v1484 = vtanh.pop %v1420
        %v1485 = vtanh.pop %v1421
        %v1486 = vtanh.pop %v1422
        %v1487 = vtanh.pop %v1423
        %v1488 = vtanh.pop %v1424
        %v1489 = vtanh.pop %v1425
        %v1490 = vtanh.pop %v1426
        %v1491 = vtanh.pop %v1427
        %v1492 = vtanh.pop %v1428
        %v1493 = vtanh.pop %v1429
        %v1494 = vtanh.pop %v1430
        %v1495 = vtanh.pop %v1431
        %v1496 = vtanh.pop %v1432
        %v1497 = vtanh.pop %v1433
        %v1498 = vtanh.pop %v1434
        %v1499 = vtanh.pop %v1435
        %v1500 = vtanh.pop %v1436
        %v1501 = vtanh.pop %v1437
        %v1502 = vtanh.pop %v1438
        %v1503 = vtanh.pop %v1439
        %v1504 = vtanh.pop %v1440
        %v1505 = vtanh.pop %v1441
        %v1506 = vtanh.pop %v1442
        %v1507 = vtanh.pop %v1443
        %v1508 = vtanh.pop %v1444
        %v1509 = vtanh.pop %v1445
        %v1510 = vtanh.pop %v1446
        %v1511 = vtanh.pop %v1447
        %v1512 = vtanh.pop %v1448
        %v1513 = vtanh.pop %v1449
        %v1514 = vtanh.pop %v1450
        %v1515 = vtanh.pop %v1451
        %v1516 = vtanh.pop %v1452
        %v1517 = vtanh.pop %v1453
        %v1518 = vtanh.pop %v1454
        %v1519 = vtanh.pop %v1455
        %v1520 = vtanh.pop %v1456
        %v1521 = vtanh.pop %v1457
        %v1522 = vtanh.pop %v1458
        %v1523 = vtanh.pop %v1459
        %v1524 = vtanh.pop %v1460
        %v1525 = vtanh.pop %v1461
        %v1526 = vtanh.pop %v1462
        %v1527 = vtanh.pop %v1463
        %v1528 = vtanh.pop %v1464
        %v1529 = vtanh.pop %v1465
        %v1530 = vtanh.pop %v1466
        %v1531 = vtanh.pop %v1467
        %v1532 = vtanh.pop %v1468
        %v1533 = vtanh.pop %v1469
        %v1534 = vtanh.pop %v1470
        %v1535 = vtanh.pop %v1471
        %v1536 = vtanh.pop %v1472
        %v1537 = vtanh.pop %v1473
        %v1538 = vtanh.pop %v1474
        %v1539 = vtanh.pop %v1475
        %v1540 = vadd.f32 %v1476, 1.0
        %v1541 = vadd.f32 %v1477, 1.0
        %v1542 = vadd.f32 %v1478, 1.0
        %v1543 = vadd.f32 %v1479, 1.0
        %v1544 = vadd.f32 %v1480, 1.0
        %v1545 = vadd.f32 %v1481, 1.0
        %v1546 = vadd.f32 %v1482, 1.0
        %v1547 = vadd.f32 %v1483, 1.0
        %v1548 = vadd.f32 %v1484, 1.0
        %v1549 = vadd.f32 %v1485, 1.0
        %v1550 = vadd.f32 %v1486, 1.0
        %v1551 = vadd.f32 %v1487, 1.0
        %v1552 = vadd.f32 %v1488, 1.0
        %v1553 = vadd.f32 %v1489, 1.0
        %v1554 = vadd.f32 %v1490, 1.0
        %v1555 = vadd.f32 %v1491, 1.0
        %v1556 = vadd.f32 %v1492, 1.0
        %v1557 = vadd.f32 %v1493, 1.0
        %v1558 = vadd.f32 %v1494, 1.0
        %v1559 = vadd.f32 %v1495, 1.0
        %v1560 = vadd.f32 %v1496, 1.0
        %v1561 = vadd.f32 %v1497, 1.0
        %v1562 = vadd.f32 %v1498, 1.0
        %v1563 = vadd.f32 %v1499, 1.0
        %v1564 = vadd.f32 %v1500, 1.0
        %v1565 = vadd.f32 %v1501, 1.0
        %v1566 = vadd.f32 %v1502, 1.0
        %v1567 = vadd.f32 %v1503, 1.0
        %v1568 = vadd.f32 %v1504, 1.0
        %v1569 = vadd.f32 %v1505, 1.0
        %v1570 = vadd.f32 %v1506, 1.0
        %v1571 = vadd.f32 %v1507, 1.0
        %v1572 = vadd.f32 %v1508, 1.0
        %v1573 = vadd.f32 %v1509, 1.0
        %v1574 = vadd.f32 %v1510, 1.0
        %v1575 = vadd.f32 %v1511, 1.0
        %v1576 = vadd.f32 %v1512, 1.0
        %v1577 = vadd.f32 %v1513, 1.0
        %v1578 = vadd.f32 %v1514, 1.0
        %v1579 = vadd.f32 %v1515, 1.0
        %v1580 = vadd.f32 %v1516, 1.0
        %v1581 = vadd.f32 %v1517, 1.0
        %v1582 = vadd.f32 %v1518, 1.0
        %v1583 = vadd.f32 %v1519, 1.0
        %v1584 = vadd.f32 %v1520, 1.0
        %v1585 = vadd.f32 %v1521, 1.0
        %v1586 = vadd.f32 %v1522, 1.0
        %v1587 = vadd.f32 %v1523, 1.0
        %v1588 = vadd.f32 %v1524, 1.0
        %v1589 = vadd.f32 %v1525, 1.0
        %v1590 = vadd.f32 %v1526, 1.0
        %v1591 = vadd.f32 %v1527, 1.0
        %v1592 = vadd.f32 %v1528, 1.0
        %v1593 = vadd.f32 %v1529, 1.0
        %v1594 = vadd.f32 %v1530, 1.0
        %v1595 = vadd.f32 %v1531, 1.0
        %v1596 = vadd.f32 %v1532, 1.0
        %v1597 = vadd.f32 %v1533, 1.0
        %v1598 = vadd.f32 %v1534, 1.0
        %v1599 = vadd.f32 %v1535, 1.0
        %v1600 = vadd.f32 %v1536, 1.0
        %v1601 = vadd.f32 %v1537, 1.0
        %v1602 = vadd.f32 %v1538, 1.0
        %v1603 = vadd.f32 %v1539, 1.0
        %v1604 = vmul.f32 %v1092, %v1540
        %v1605 = vmul.f32 %v1093, %v1541
        %v1606 = vmul.f32 %v1094, %v1542
        %v1607 = vmul.f32 %v1095, %v1543
        %v1608 = vmul.f32 %v1096, %v1544
        %v1609 = vmul.f32 %v1097, %v1545
        %v1610 = vmul.f32 %v1098, %v1546
        %v1611 = vmul.f32 %v1099, %v1547
        %v1612 = vmul.f32 %v1100, %v1548
        %v1613 = vmul.f32 %v1101, %v1549
        %v1614 = vmul.f32 %v1102, %v1550
        %v1615 = vmul.f32 %v1103, %v1551
        %v1616 = vmul.f32 %v1104, %v1552
        %v1617 = vmul.f32 %v1105, %v1553
        %v1618 = vmul.f32 %v1106, %v1554
        %v1619 = vmul.f32 %v1107, %v1555
        %v1620 = vmul.f32 %v1108, %v1556
        %v1621 = vmul.f32 %v1109, %v1557
        %v1622 = vmul.f32 %v1110, %v1558
        %v1623 = vmul.f32 %v1111, %v1559
        %v1624 = vmul.f32 %v1112, %v1560
        %v1625 = vmul.f32 %v1113, %v1561
        %v1626 = vmul.f32 %v1114, %v1562
        %v1627 = vmul.f32 %v1115, %v1563
        %v1628 = vmul.f32 %v1116, %v1564
        %v1629 = vmul.f32 %v1117, %v1565
        %v1630 = vmul.f32 %v1118, %v1566
        %v1631 = vmul.f32 %v1119, %v1567
        %v1632 = vmul.f32 %v1120, %v1568
        %v1633 = vmul.f32 %v1121, %v1569
        %v1634 = vmul.f32 %v1122, %v1570
        %v1635 = vmul.f32 %v1123, %v1571
        %v1636 = vmul.f32 %v1124, %v1572
        %v1637 = vmul.f32 %v1125, %v1573
        %v1638 = vmul.f32 %v1126, %v1574
        %v1639 = vmul.f32 %v1127, %v1575
        %v1640 = vmul.f32 %v1128, %v1576
        %v1641 = vmul.f32 %v1129, %v1577
        %v1642 = vmul.f32 %v1130, %v1578
        %v1643 = vmul.f32 %v1131, %v1579
        %v1644 = vmul.f32 %v1132, %v1580
        %v1645 = vmul.f32 %v1133, %v1581
        %v1646 = vmul.f32 %v1134, %v1582
        %v1647 = vmul.f32 %v1135, %v1583
        %v1648 = vmul.f32 %v1136, %v1584
        %v1649 = vmul.f32 %v1137, %v1585
        %v1650 = vmul.f32 %v1138, %v1586
        %v1651 = vmul.f32 %v1139, %v1587
        %v1652 = vmul.f32 %v1140, %v1588
        %v1653 = vmul.f32 %v1141, %v1589
        %v1654 = vmul.f32 %v1142, %v1590
        %v1655 = vmul.f32 %v1143, %v1591
        %v1656 = vmul.f32 %v1144, %v1592
        %v1657 = vmul.f32 %v1145, %v1593
        %v1658 = vmul.f32 %v1146, %v1594
        %v1659 = vmul.f32 %v1147, %v1595
        %v1660 = vmul.f32 %v1148, %v1596
        %v1661 = vmul.f32 %v1149, %v1597
        %v1662 = vmul.f32 %v1150, %v1598
        %v1663 = vmul.f32 %v1151, %v1599
        %v1664 = vmul.f32 %v1152, %v1600
        %v1665 = vmul.f32 %v1153, %v1601
        %v1666 = vmul.f32 %v1154, %v1602
        %v1667 = vmul.f32 %v1155, %v1603
        %v1668 = vld [vmem:[#allocation7] sm:$0xff]
        %v1669 = vld [vmem:[#allocation7 + $0x8] sm:$0xff]
        %v1670 = vld [vmem:[#allocation7 + $0x10] sm:$0xff]
        %v1671 = vld [vmem:[#allocation7 + $0x18] sm:$0xff]
        %v1672 = vld [vmem:[#allocation7 + $0x20] sm:$0xff]
        %v1673 = vld [vmem:[#allocation7 + $0x28] sm:$0xff]
        %v1674 = vld [vmem:[#allocation7 + $0x30] sm:$0xff]
        %v1675 = vld [vmem:[#allocation7 + $0x38] sm:$0xff]
        %v1676 = vld [vmem:[#allocation7 + $0x40] sm:$0xff]
        %v1677 = vld [vmem:[#allocation7 + $0x48] sm:$0xff]
        %v1678 = vld [vmem:[#allocation7 + $0x50] sm:$0xff]
        %v1679 = vld [vmem:[#allocation7 + $0x58] sm:$0xff]
        %v1680 = vld [vmem:[#allocation7 + $0x60] sm:$0xff]
        %v1681 = vld [vmem:[#allocation7 + $0x68] sm:$0xff]
        %v1682 = vld [vmem:[#allocation7 + $0x70] sm:$0xff]
        %v1683 = vld [vmem:[#allocation7 + $0x78] sm:$0xff]
        %v1684 = vld [vmem:[#allocation7 + $0x80] sm:$0xff]
        %v1685 = vld [vmem:[#allocation7 + $0x88] sm:$0xff]
        %v1686 = vld [vmem:[#allocation7 + $0x90] sm:$0xff]
        %v1687 = vld [vmem:[#allocation7 + $0x98] sm:$0xff]
        %v1688 = vld [vmem:[#allocation7 + $0xa0] sm:$0xff]
        %v1689 = vld [vmem:[#allocation7 + $0xa8] sm:$0xff]
        %v1690 = vld [vmem:[#allocation7 + $0xb0] sm:$0xff]
        %v1691 = vld [vmem:[#allocation7 + $0xb8] sm:$0xff]
        %v1692 = vld [vmem:[#allocation7 + $0xc0] sm:$0xff]
        %v1693 = vld [vmem:[#allocation7 + $0xc8] sm:$0xff]
        %v1694 = vld [vmem:[#allocation7 + $0xd0] sm:$0xff]
        %v1695 = vld [vmem:[#allocation7 + $0xd8] sm:$0xff]
        %v1696 = vld [vmem:[#allocation7 + $0xe0] sm:$0xff]
        %v1697 = vld [vmem:[#allocation7 + $0xe8] sm:$0xff]
        %v1698 = vld [vmem:[#allocation7 + $0xf0] sm:$0xff]
        %v1699 = vld [vmem:[#allocation7 + $0xf8] sm:$0xff]
        %v1700 = vld [vmem:[%s6] sm:$0x1]
        %v1702 = vlaneseq
        %v1703 = vshrl.u32 %v1702, 7
        %v1704 = vsub.s32 0, %v1703
        %v1705 = vrot.slane %v1700, %v1704
        %1707 = vmatprep.subr.mxu0 0.0
        %1708 = vmatpush1.msra.mxu0 %v1668
        %1709 = vmatprep.subr.mxu0 0.0
        %1710 = vmatpush1.msra.mxu0 %v1669
        %1711 = vmatprep.subr.mxu0 0.0
        %1712 = vmatpush1.msra.mxu0 %v1670
        %1713 = vmatprep.subr.mxu0 0.0
        %1714 = vmatpush1.msra.mxu0 %v1671
        %1715 = vmatprep.subr.mxu0 0.0
        %1716 = vmatpush1.msra.mxu0 %v1672
        %1717 = vmatprep.subr.mxu0 0.0
        %1718 = vmatpush1.msra.mxu0 %v1673
        %1719 = vmatprep.subr.mxu0 0.0
        %1720 = vmatpush1.msra.mxu0 %v1674
        %1721 = vmatprep.subr.mxu0 0.0
        %1722 = vmatpush1.msra.mxu0 %v1675
        %1723 = vmatprep.subr.mxu0 0.0
        %1724 = vmatpush1.msra.mxu0 %v1676
        %1725 = vmatprep.subr.mxu0 0.0
        %1726 = vmatpush1.msra.mxu0 %v1677
        %1727 = vmatprep.subr.mxu0 0.0
        %1728 = vmatpush1.msra.mxu0 %v1678
        %1729 = vmatprep.subr.mxu0 0.0
        %1730 = vmatpush1.msra.mxu0 %v1679
        %1731 = vmatprep.subr.mxu0 0.0
        %1732 = vmatpush1.msra.mxu0 %v1680
        %1733 = vmatprep.subr.mxu0 0.0
        %1734 = vmatpush1.msra.mxu0 %v1681
        %1735 = vmatprep.subr.mxu0 0.0
        %1736 = vmatpush1.msra.mxu0 %v1682
        %1737 = vmatprep.subr.mxu0 0.0
        %1738 = vmatpush1.msra.mxu0 %v1683
        %1739 = vmatprep.subr.mxu0 0.0
        %1740 = vmatpush1.msra.mxu0 %v1684
        %1741 = vmatprep.subr.mxu0 0.0
        %1742 = vmatpush1.msra.mxu0 %v1685
        %1743 = vmatprep.subr.mxu0 0.0
        %1744 = vmatpush1.msra.mxu0 %v1686
        %1745 = vmatprep.subr.mxu0 0.0
        %1746 = vmatpush1.msra.mxu0 %v1687
        %1747 = vmatprep.subr.mxu0 0.0
        %1748 = vmatpush1.msra.mxu0 %v1688
        %1749 = vmatprep.subr.mxu0 0.0
        %1750 = vmatpush1.msra.mxu0 %v1689
        %1751 = vmatprep.subr.mxu0 0.0
        %1752 = vmatpush1.msra.mxu0 %v1690
        %1753 = vmatprep.subr.mxu0 0.0
        %1754 = vmatpush1.msra.mxu0 %v1691
        %1755 = vmatprep.subr.mxu0 0.0
        %1756 = vmatpush1.msra.mxu0 %v1692
        %1757 = vmatprep.subr.mxu0 0.0
        %1758 = vmatpush1.msra.mxu0 %v1693
        %1759 = vmatprep.subr.mxu0 0.0
        %1760 = vmatpush1.msra.mxu0 %v1694
        %1761 = vmatprep.subr.mxu0 0.0
        %1762 = vmatpush1.msra.mxu0 %v1695
        %1763 = vmatprep.subr.mxu0 0.0
        %1764 = vmatpush1.msra.mxu0 %v1696
        %1765 = vmatprep.subr.mxu0 0.0
        %1766 = vmatpush1.msra.mxu0 %v1697
        %1767 = vmatprep.subr.mxu0 0.0
        %1768 = vmatpush1.msra.mxu0 %v1698
        %1769 = vmatprep.subr.mxu0 0.0
        %1770 = vmatpush1.msra.mxu0 %v1699
        %1771 = vmatprep.mubr.f32.mxu0 %v1605
        %1772 = vmatmul.mubr.f32.gmra.mrb[0].mxu0 %v1604
        %v1773 = vpop.f32.mrb[0].mxu0
        %v1774 = vadd.f32 %v1705, %v1773
        %v1775 = vpop.f32.mrb[0].mxu0
        %1776 = vmatprep.mubr.f32.mxu0 %v1607
        %1777 = vmatmul.mubr.f32.gmra.mrb[0].mxu0 %v1606
        %v1778 = vpop.f32.mrb[0].mxu0
        %v1779 = vadd.f32 %v1705, %v1778
        %v1780 = vpop.f32.mrb[0].mxu0
        %1781 = vmatprep.mubr.f32.mxu0 %v1609
        %1782 = vmatmul.mubr.f32.gmra.mrb[0].mxu0 %v1608
        %v1783 = vpop.f32.mrb[0].mxu0
        %v1784 = vadd.f32 %v1705, %v1783
        %v1785 = vpop.f32.mrb[0].mxu0
        %1786 = vmatprep.mubr.f32.mxu0 %v1611
        %1787 = vmatmul.mubr.f32.gmra.mrb[0].mxu0 %v1610
        %v1788 = vpop.f32.mrb[0].mxu0
        %v1789 = vadd.f32 %v1705, %v1788
        %v1790 = vpop.f32.mrb[0].mxu0
        %1791 = vmatprep.mubr.f32.mxu0 %v1613
        %1792 = vmatmul.mubr.f32.gmra.mrb[0].mxu0 %v1612
        %v1793 = vpop.f32.mrb[0].mxu0
        %v1794 = vadd.f32 %v1705, %v1793
        %v1795 = vpop.f32.mrb[0].mxu0
        %1796 = vmatprep.mubr.f32.mxu0 %v1615
        %1797 = vmatmul.mubr.f32.gmra.mrb[0].mxu0 %v1614
        %v1798 = vpop.f32.mrb[0].mxu0
        %v1799 = vadd.f32 %v1705, %v1798
        %v1800 = vpop.f32.mrb[0].mxu0
        %1801 = vmatprep.mubr.f32.mxu0 %v1617
        %1802 = vmatmul.mubr.f32.gmra.mrb[0].mxu0 %v1616
        %v1803 = vpop.f32.mrb[0].mxu0
        %v1804 = vadd.f32 %v1705, %v1803
        %v1805 = vpop.f32.mrb[0].mxu0
        %1806 = vmatprep.mubr.f32.mxu0 %v1619
        %1807 = vmatmul.mubr.f32.gmra.mrb[0].mxu0 %v1618
        %v1808 = vpop.f32.mrb[0].mxu0
        %v1809 = vadd.f32 %v1705, %v1808
        %v1810 = vpop.f32.mrb[0].mxu0
        %1811 = vmatprep.mubr.f32.mxu0 %v1621
        %1812 = vmatmul.mubr.f32.gmra.mrb[0].mxu0 %v1620
        %v1813 = vpop.f32.mrb[0].mxu0
        %v1814 = vadd.f32 %v1705, %v1813
        %v1815 = vpop.f32.mrb[0].mxu0
        %1816 = vmatprep.mubr.f32.mxu0 %v1623
        %1817 = vmatmul.mubr.f32.gmra.mrb[0].mxu0 %v1622
        %v1818 = vpop.f32.mrb[0].mxu0
        %v1819 = vadd.f32 %v1705, %v1818
        %v1820 = vpop.f32.mrb[0].mxu0
        %1821 = vmatprep.mubr.f32.mxu0 %v1625
        %1822 = vmatmul.mubr.f32.gmra.mrb[0].mxu0 %v1624
        %v1823 = vpop.f32.mrb[0].mxu0
        %v1824 = vadd.f32 %v1705, %v1823
        %v1825 = vpop.f32.mrb[0].mxu0
        %1826 = vmatprep.mubr.f32.mxu0 %v1627
        %1827 = vmatmul.mubr.f32.gmra.mrb[0].mxu0 %v1626
        %v1828 = vpop.f32.mrb[0].mxu0
        %v1829 = vadd.f32 %v1705, %v1828
        %v1830 = vpop.f32.mrb[0].mxu0
        %1831 = vmatprep.mubr.f32.mxu0 %v1629
        %1832 = vmatmul.mubr.f32.gmra.mrb[0].mxu0 %v1628
        %v1833 = vpop.f32.mrb[0].mxu0
        %v1834 = vadd.f32 %v1705, %v1833
        %v1835 = vpop.f32.mrb[0].mxu0
        %1836 = vmatprep.mubr.f32.mxu0 %v1631
        %1837 = vmatmul.mubr.f32.gmra.mrb[0].mxu0 %v1630
        %v1838 = vpop.f32.mrb[0].mxu0
        %v1839 = vadd.f32 %v1705, %v1838
        %v1840 = vpop.f32.mrb[0].mxu0
        %1841 = vmatprep.mubr.f32.mxu0 %v1633
        %1842 = vmatmul.mubr.f32.gmra.mrb[0].mxu0 %v1632
        %v1843 = vpop.f32.mrb[0].mxu0
        %v1844 = vadd.f32 %v1705, %v1843
        %v1845 = vpop.f32.mrb[0].mxu0
        %1846 = vmatprep.mubr.f32.mxu0 %v1635
        %1847 = vmatmul.mubr.f32.gmra.mrb[0].mxu0 %v1634
        %v1848 = vpop.f32.mrb[0].mxu0
        %v1849 = vadd.f32 %v1705, %v1848
        %v1850 = vpop.f32.mrb[0].mxu0
        %1851 = vmatprep.mubr.f32.mxu0 %v1637
        %1852 = vmatmul.mubr.f32.gmra.mrb[0].mxu0 %v1636
        %v1853 = vpop.f32.mrb[0].mxu0
        %v1854 = vadd.f32 %v1705, %v1853
        %v1855 = vpop.f32.mrb[0].mxu0
        %1856 = vmatprep.mubr.f32.mxu0 %v1639
        %1857 = vmatmul.mubr.f32.gmra.mrb[0].mxu0 %v1638
        %v1858 = vpop.f32.mrb[0].mxu0
        %v1859 = vadd.f32 %v1705, %v1858
        %v1860 = vpop.f32.mrb[0].mxu0
        %1861 = vmatprep.mubr.f32.mxu0 %v1641
        %1862 = vmatmul.mubr.f32.gmra.mrb[0].mxu0 %v1640
        %v1863 = vpop.f32.mrb[0].mxu0
        %v1864 = vadd.f32 %v1705, %v1863
        %v1865 = vpop.f32.mrb[0].mxu0
        %1866 = vmatprep.mubr.f32.mxu0 %v1643
        %1867 = vmatmul.mubr.f32.gmra.mrb[0].mxu0 %v1642
        %v1868 = vpop.f32.mrb[0].mxu0
        %v1869 = vadd.f32 %v1705, %v1868
        %v1870 = vpop.f32.mrb[0].mxu0
        %1871 = vmatprep.mubr.f32.mxu0 %v1645
        %1872 = vmatmul.mubr.f32.gmra.mrb[0].mxu0 %v1644
        %v1873 = vpop.f32.mrb[0].mxu0
        %v1874 = vadd.f32 %v1705, %v1873
        %v1875 = vpop.f32.mrb[0].mxu0
        %1876 = vmatprep.mubr.f32.mxu0 %v1647
        %1877 = vmatmul.mubr.f32.gmra.mrb[0].mxu0 %v1646
        %v1878 = vpop.f32.mrb[0].mxu0
        %v1879 = vadd.f32 %v1705, %v1878
        %v1880 = vpop.f32.mrb[0].mxu0
        %1881 = vmatprep.mubr.f32.mxu0 %v1649
        %1882 = vmatmul.mubr.f32.gmra.mrb[0].mxu0 %v1648
        %v1883 = vpop.f32.mrb[0].mxu0
        %v1884 = vadd.f32 %v1705, %v1883
        %v1885 = vpop.f32.mrb[0].mxu0
        %1886 = vmatprep.mubr.f32.mxu0 %v1651
        %1887 = vmatmul.mubr.f32.gmra.mrb[0].mxu0 %v1650
        %v1888 = vpop.f32.mrb[0].mxu0
        %v1889 = vadd.f32 %v1705, %v1888
        %v1890 = vpop.f32.mrb[0].mxu0
        %1891 = vmatprep.mubr.f32.mxu0 %v1653
        %1892 = vmatmul.mubr.f32.gmra.mrb[0].mxu0 %v1652
        %v1893 = vpop.f32.mrb[0].mxu0
        %v1894 = vadd.f32 %v1705, %v1893
        %v1895 = vpop.f32.mrb[0].mxu0
        %1896 = vmatprep.mubr.f32.mxu0 %v1655
        %1897 = vmatmul.mubr.f32.gmra.mrb[0].mxu0 %v1654
        %v1898 = vpop.f32.mrb[0].mxu0
        %v1899 = vadd.f32 %v1705, %v1898
        %v1900 = vpop.f32.mrb[0].mxu0
        %1901 = vmatprep.mubr.f32.mxu0 %v1657
        %1902 = vmatmul.mubr.f32.gmra.mrb[0].mxu0 %v1656
        %v1903 = vpop.f32.mrb[0].mxu0
        %v1904 = vadd.f32 %v1705, %v1903
        %v1905 = vpop.f32.mrb[0].mxu0
        %1906 = vmatprep.mubr.f32.mxu0 %v1659
        %1907 = vmatmul.mubr.f32.gmra.mrb[0].mxu0 %v1658
        %v1908 = vpop.f32.mrb[0].mxu0
        %v1909 = vadd.f32 %v1705, %v1908
        %v1910 = vpop.f32.mrb[0].mxu0
        %1911 = vmatprep.mubr.f32.mxu0 %v1661
        %1912 = vmatmul.mubr.f32.gmra.mrb[0].mxu0 %v1660
        %v1913 = vpop.f32.mrb[0].mxu0
        %v1914 = vadd.f32 %v1705, %v1913
        %v1915 = vpop.f32.mrb[0].mxu0
        %1916 = vmatprep.mubr.f32.mxu0 %v1663
        %1917 = vmatmul.mubr.f32.gmra.mrb[0].mxu0 %v1662
        %v1918 = vpop.f32.mrb[0].mxu0
        %v1919 = vadd.f32 %v1705, %v1918
        %v1920 = vpop.f32.mrb[0].mxu0
        %1921 = vmatprep.mubr.f32.mxu0 %v1665
        %1922 = vmatmul.mubr.f32.gmra.mrb[0].mxu0 %v1664
        %v1923 = vpop.f32.mrb[0].mxu0
        %v1924 = vadd.f32 %v1705, %v1923
        %v1925 = vpop.f32.mrb[0].mxu0
        %1926 = vmatprep.mubr.f32.mxu0 %v1667
        %1927 = vmatmul.mubr.f32.gmra.mrb[0].mxu0 %v1666
        %v1928 = vpop.f32.mrb[0].mxu0
        %v1929 = vadd.f32 %v1705, %v1928
        %v1930 = vpop.f32.mrb[0].mxu0
        %1931 = vdwg.mxu0
        %1932 = vst [vmem:[%s325] sm:$0xff] %v1774
        %1933 = vst [vmem:[%s325 + $0x8] sm:$0xff] %v1779
        %1934 = vst [vmem:[%s325 + $0x10] sm:$0xff] %v1784
        %1935 = vst [vmem:[%s325 + $0x18] sm:$0xff] %v1789
        %1936 = vst [vmem:[%s325 + $0x20] sm:$0xff] %v1794
        %1937 = vst [vmem:[%s325 + $0x28] sm:$0xff] %v1799
        %1938 = vst [vmem:[%s325 + $0x30] sm:$0xff] %v1804
        %1939 = vst [vmem:[%s325 + $0x38] sm:$0xff] %v1809
        %1940 = vst [vmem:[%s325 + $0x40] sm:$0xff] %v1814
        %1941 = vst [vmem:[%s325 + $0x48] sm:$0xff] %v1819
        %1942 = vst [vmem:[%s325 + $0x50] sm:$0xff] %v1824
        %1943 = vst [vmem:[%s325 + $0x58] sm:$0xff] %v1829
        %1944 = vst [vmem:[%s325 + $0x60] sm:$0xff] %v1834
        %1945 = vst [vmem:[%s325 + $0x68] sm:$0xff] %v1839
        %1946 = vst [vmem:[%s325 + $0x70] sm:$0xff] %v1844
        %1947 = vst [vmem:[%s325 + $0x78] sm:$0xff] %v1849
        %1948 = vst [vmem:[%s325 + $0x80] sm:$0xff] %v1854
        %1949 = vst [vmem:[%s325 + $0x88] sm:$0xff] %v1859
        %1950 = vst [vmem:[%s325 + $0x90] sm:$0xff] %v1864
        %1951 = vst [vmem:[%s325 + $0x98] sm:$0xff] %v1869
        %1952 = vst [vmem:[%s325 + $0xa0] sm:$0xff] %v1874
        %1953 = vst [vmem:[%s325 + $0xa8] sm:$0xff] %v1879
        %1954 = vst [vmem:[%s325 + $0xb0] sm:$0xff] %v1884
        %1955 = vst [vmem:[%s325 + $0xb8] sm:$0xff] %v1889
        %1956 = vst [vmem:[%s325 + $0xc0] sm:$0xff] %v1894
        %1957 = vst [vmem:[%s325 + $0xc8] sm:$0xff] %v1899
        %1958 = vst [vmem:[%s325 + $0xd0] sm:$0xff] %v1904
        %1959 = vst [vmem:[%s325 + $0xd8] sm:$0xff] %v1909
        %1960 = vst [vmem:[%s325 + $0xe0] sm:$0xff] %v1914
        %1961 = vst [vmem:[%s325 + $0xe8] sm:$0xff] %v1919
        %1962 = vst [vmem:[%s325 + $0xf0] sm:$0xff] %v1924
        %1963 = vst [vmem:[%s325 + $0xf8] sm:$0xff] %v1929
        %s1964 = sand.u32 %s185, 1
        %s1965 = scalar_lea.sflag [#allocation4], %s1964
        %s1966 = sand.u32 %s185, 1
        %s1967 = smul.addr %s1966, 256
        %s1968 = scalar_lea.vmem [#allocation8], %s1967
        // Predicated region
        $region61: #{tpu_custom_call.1} parent=47 // pred_check
          %p1969 = pneg %p195
        $region62: #{tpu_custom_call.1} parent=47 // pred_check_branch
          %1971 = sbr.rel (%p1969) target = $region64
        $region63: #{tpu_custom_call.1} parent=47 // pred_region
          %s1972 = smul.u32 32, %s25
          %s1974 = ssub.s32 4096, 4096
          %1975 = vsyncadd %s1965, %s1974
          %s1976 = smul.addr %s1972, 128
          %s1977 = scalar_lea.hbm %s7, %s1976
          %s1978 = sshll.u32 %s1968, 4
          %s1979 = int_to_ptr.vmem [resolvable:$true] %s1978
          %1984 = dma.vmem_to_hbm [thread:$0]  %s1979, 4096, %s1977, %s1965, 128, 128, 8
        $region64: #{tpu_custom_call.1} parent=47 // pred_fallthru
          _
      $region48: #{tpu_custom_call.1} parent=5 // pred_fallthru
        _
      %p1985 = scmp.le.s32.totalorder 2, %s20
      // Predicated region
      $region65: #{tpu_custom_call.1} parent=5 // pred_check
        %p1986 = pneg %p1985
      $region66: #{tpu_custom_call.1} parent=5 // pred_check_branch
        %1988 = sbr.rel (%p1986) target = $region68
      $region67: #{tpu_custom_call.1} parent=5 // pred_region
        %s1989 = ssub.s32 %s20, 2
        // Predicated region
        $region69: #{tpu_custom_call.1} parent=67 // pred_check
          %p1990 = pneg %p201
        $region70: #{tpu_custom_call.1} parent=67 // pred_check_branch
          %1992 = sbr.rel (%p1990) target = $region72
        $region71: #{tpu_custom_call.1} parent=67 // pred_region
          %s1993 = sand.u32 %s186, 1
          %s1994 = scalar_lea.sflag [#allocation4], %s1993
          %s1995 = sand.u32 %s186, 1
          %s1996 = smul.addr %s1995, 256
          %s1997 = scalar_lea.vmem [#allocation8], %s1996
          %1998 = dma.done %s1994, 4096
        $region72: #{tpu_custom_call.1} parent=67 // pred_fallthru
          _
      $region68: #{tpu_custom_call.1} parent=5 // pred_fallthru
        _
    $region6: #{tpu_custom_call.1} parent=1 // loop_footer
      %s24 = sadd.s32 1, %s20
    $region7: #{tpu_custom_call.1} parent=1 // loop_footer_branch
      %19 = sbr.rel target = $region3
    $region8: #{tpu_custom_call.1} parent=1 // loop_exit
      _
    %1999 = vsyncpa [#allocation3], 1
    %s2000 = scalar_lea.sflag [#allocation3], 1
    %2001 = vsyncpa %s2000, 1
    %2002 = vsyncpa [#allocation6], 1
    %2003 = vsyncpa [#allocation4], 1
    %s2004 = scalar_lea.sflag [#allocation4], 1
    %2005 = vsyncpa %s2004, 1

</llo_original>
